<compile_context>
chip_gen: v7x
topology: tpu7x:2x2x1
jax: 0.10.0
libtpu: 0.0.40
codegen_flags: <defaults>
</compile_context>

<pallas_src>
import math

import jax
import jax.numpy as jnp
from jax import lax
from jax.experimental import pallas as pl
from jax.experimental.pallas import tpu as pltpu


def _softmax_attn(q, k, v):
    """softmax(q @ k^T / sqrt(d_k)) @ v; bf16 MXU operands, f32 softmax math."""
    d_k = q.shape[-1]
    scores = lax.dot_general(q.astype(jnp.bfloat16), k.astype(jnp.bfloat16),
                             (((1,), (1,)), ((), ())),
                             preferred_element_type=jnp.float32)
    scores = scores * (1.0 / math.sqrt(d_k))
    scores = scores - jnp.max(scores, axis=-1, keepdims=True)
    e = jnp.exp(scores)
    inv = pl.reciprocal(jnp.sum(e, axis=-1, keepdims=True), approx=True)
    attn = (e * inv).astype(jnp.bfloat16)
    # TODO(synk): nn.Dropout(p=0.1) on attn is identity in eval mode; training-mode
    # dropout is not implemented here.
    return jnp.dot(attn, v.astype(jnp.bfloat16), preferred_element_type=jnp.float32)


def ftt_kernel(x_ref, seq_ref, wseq_ref, bseq_ref, wimg_ref, bimg_ref,
               ln1_g_ref, ln1_b_ref, ln2_g_ref, ln2_b_ref, out_ref):
    C, HW = x_ref.shape[1], x_ref.shape[2]
    C4 = wimg_ref.shape[1] - C          # wimg = [wq1 | wk1] : (C, C4 + C)

    # (C, HW) -> (HW, C): XLU transpose, exact f32 kept for the residual/LN path.
    x1 = jnp.transpose(x_ref[0], (1, 0))                              # (HW, C) f32
    x1_bf = x1.astype(jnp.bfloat16)

    # ---- Fused projections (one MXU pass per operand set), f32 accumulation.
    seq_proj = jnp.dot(seq_ref[0], wseq_ref[...],
                       preferred_element_type=jnp.float32) + bseq_ref[...]   # (L, C+C4)
    seq_v = seq_proj[:, :C]
    seq_k = seq_proj[:, C:]

    img_proj = jnp.dot(x1_bf, wimg_ref[...],
                       preferred_element_type=jnp.float32) + bimg_ref[...]   # (HW, C4+C)
    q1 = img_proj[:, :C4]
    k1 = img_proj[:, C4:]

    # ---- attention 1 (q=image_q1, k=seq_k, v=seq_v) + residual + channel LayerNorm.
    t = _softmax_attn(q1, seq_k, seq_v) + x1
    mu = jnp.mean(t, axis=-1, keepdims=True)
    var = jnp.mean((t - mu) ** 2, axis=-1, keepdims=True)
    attn_x1 = (t - mu) * lax.rsqrt(var + 1e-5) * ln1_g_ref[...] + ln1_b_ref[...]

    # ---- attention 2 (q=attn_x1, k=image_k1, v=x1) + LayerNorm over (HW, C).
    o2 = _softmax_attn(attn_x1, k1, x1)
    mu2 = jnp.mean(o2)
    var2 = jnp.mean((o2 - mu2) ** 2)
    out_ref[0] = (o2 - mu2) * lax.rsqrt(var2 + 1e-5) * ln2_g_ref[...] + ln2_b_ref[...]


@jax.jit
def ftt_forward(x, seq_feat, params):
    """x: (B, C, H, W) f32; seq_feat: (B, L, 512) f32 -> (B, H*W, C) f32."""
    B, C, H, W = x.shape
    HW = H * W
    L, D = seq_feat.shape[1], seq_feat.shape[2]
    C4 = params["wq1"].shape[1]

    x_chw = x.reshape(B, C, HW).astype(jnp.float32)     # free reshape, no XLA transpose
    seqf = seq_feat.astype(jnp.bfloat16)

    # Fused weights/biases: [wv | wk] and [wq1 | wk1].
    wseq = jnp.concatenate([params["wv"], params["wk"]], axis=1).astype(jnp.bfloat16)
    bseq = jnp.concatenate([params["bv"], params["bk"]], axis=1).astype(jnp.float32)
    wimg = jnp.concatenate([params["wq1"], params["wk1"]], axis=1).astype(jnp.bfloat16)
    bimg = jnp.concatenate([params["bq1"], params["bk1"]], axis=1).astype(jnp.float32)

    flops = B * (2 * L * D * (C + C4) + 2 * HW * C * (C4 + C)
                 + 2 * HW * L * (C4 + C) + 4 * HW * HW * C)
    transcendentals = B * (HW * L + HW * HW)
    bytes_accessed = (x_chw.size * 4 + seqf.size * 2 + wseq.size * 2 + wimg.size * 2
                      + (bseq.size + bimg.size + 2 * C + 2 * HW * C) * 4
                      + B * HW * C * 4)

    rep = lambda shape: pl.BlockSpec(shape, lambda b: (0, 0))   # replicated across grid

    out = pl.pallas_call(
        ftt_kernel,
        out_shape=jax.ShapeDtypeStruct((B, HW, C), jnp.float32),
        grid=(B,),
        in_specs=[
            pl.BlockSpec((1, C, HW), lambda b: (b, 0, 0)),      # x (per-batch block)
            pl.BlockSpec((1, L, D), lambda b: (b, 0, 0)),       # seq_feat
            rep((D, C + C4)), rep((1, C + C4)),                 # fused seq weights/bias
            rep((C, C4 + C)), rep((1, C4 + C)),                 # fused img weights/bias
            rep((1, C)), rep((1, C)),                           # LN1 gamma/beta
            rep((HW, C)), rep((HW, C)),                         # LN2 gamma/beta
        ],
        out_specs=pl.BlockSpec((1, HW, C), lambda b: (b, 0, 0)),
        compiler_params=pltpu.CompilerParams(
            dimension_semantics=("parallel",)),                 # batch across TCs on v7x
        cost_estimate=pl.CostEstimate(
            flops=flops, transcendentals=transcendentals,
            bytes_accessed=bytes_accessed),
    )(
        x_chw, seqf, wseq, bseq, wimg, bimg,
        params["ln1_g"].astype(jnp.float32), params["ln1_b"].astype(jnp.float32),
        params["ln2_g"].astype(jnp.float32), params["ln2_b"].astype(jnp.float32),
    )
    return out                                                  # already (B, HW, C)


def ftt_reference(x, seq_feat, params):
    """Pure-JAX f32 reference of the PyTorch forward (eval mode)."""
    B, C, H, W = x.shape
    HW = H * W
    x1 = jnp.transpose(x.reshape(B, C, HW), (0, 2, 1))  # (B, HW, C)

    seq_v = seq_feat @ params["wv"] + params["bv"]
    seq_k = seq_feat @ params["wk"] + params["bk"]
    q1 = x1 @ params["wq1"] + params["bq1"]
    k1 = x1 @ params["wk1"] + params["bk1"]

    def attn(q, k, v):
        s = jnp.einsum("bqd,bkd->bqk", q, k) / math.sqrt(q.shape[-1])
        a = jax.nn.softmax(s, axis=-1)
        return jnp.einsum("bqk,bkd->bqd", a, v)

    t = attn(q1, seq_k, seq_v) + x1
    mu = jnp.mean(t, axis=-1, keepdims=True)
    var = jnp.mean((t - mu) ** 2, axis=-1, keepdims=True)
    attn_x1 = (t - mu) / jnp.sqrt(var + 1e-5) * params["ln1_g"] + params["ln1_b"]

    o2 = attn(attn_x1, k1, x1)
    mu2 = jnp.mean(o2, axis=(1, 2), keepdims=True)
    var2 = jnp.mean((o2 - mu2) ** 2, axis=(1, 2), keepdims=True)
    return (o2 - mu2) / jnp.sqrt(var2 + 1e-5) * params["ln2_g"] + params["ln2_b"]


def init_params(key, channels, img_size):
    C = channels
    C4 = C // 4
    HW = img_size * img_size
    ks = jax.random.split(key, 8)
    scale = 0.02
    return {
        "wv":  scale * jax.random.normal(ks[0], (512, C), jnp.float32),
        "bv":  scale * jax.random.normal(ks[1], (1, C), jnp.float32),
        "wk":  scale * jax.random.normal(ks[2], (512, C4), jnp.float32),
        "bk":  scale * jax.random.normal(ks[3], (1, C4), jnp.float32),
        "wq1": scale * jax.random.normal(ks[4], (C, C4), jnp.float32),
        "bq1": scale * jax.random.normal(ks[5], (1, C4), jnp.float32),
        "wk1": scale * jax.random.normal(ks[6], (C, C), jnp.float32),
        "bk1": scale * jax.random.normal(ks[7], (1, C), jnp.float32),
        "ln1_g": jnp.ones((1, C), jnp.float32),
        "ln1_b": jnp.zeros((1, C), jnp.float32),
        "ln2_g": jnp.ones((HW, C), jnp.float32),
        "ln2_b": jnp.zeros((HW, C), jnp.float32),
    }


if __name__ == "__main__":
    B, C, IMG, L = 2, 32, 8, 8      # x: (2, 32, 8, 8), seq_feat: (2, 8, 512)

    key = jax.random.PRNGKey(0)
    kx, ks, kp = jax.random.split(key, 3)
    x = jax.random.normal(kx, (B, C, IMG, IMG), jnp.float32)
    seq_feat = jax.random.normal(ks, (B, L, 512), jnp.float32)
    params = init_params(kp, C, IMG)

    out = ftt_forward(x, seq_feat, params)
    out = jax.block_until_ready(out)

    ref = ftt_reference(x, seq_feat, params)
    assert out.shape == (B, IMG * IMG, C), out.shape
    err = float(jnp.max(jnp.abs(out - ref)))
    assert jnp.allclose(out, ref, atol=2e-2, rtol=2e-2), err

    print("KERNEL_OK")
</pallas_src>

<mosaic_0001>
module attributes {stable_mosaic.version = 11 : i64} {
  func.func @ftt_kernel(%arg0: i32, %arg1: memref<1x32x64xf32, #tpu.memory_space<vmem>>, %arg2: memref<1x8x512xbf16, #tpu.memory_space<vmem>>, %arg3: memref<512x40xbf16, #tpu.memory_space<vmem>>, %arg4: memref<1x40xf32, #tpu.memory_space<vmem>>, %arg5: memref<32x40xbf16, #tpu.memory_space<vmem>>, %arg6: memref<1x40xf32, #tpu.memory_space<vmem>>, %arg7: memref<1x32xf32, #tpu.memory_space<vmem>>, %arg8: memref<1x32xf32, #tpu.memory_space<vmem>>, %arg9: memref<64x32xf32, #tpu.memory_space<vmem>>, %arg10: memref<64x32xf32, #tpu.memory_space<vmem>>, %arg11: memref<1x64x32xf32, #tpu.memory_space<vmem>>) attributes {dimension_semantics = [#tpu.dimension_semantics<parallel>], iteration_bounds = array<i64: 2>, scalar_prefetch = 0 : i64, scratch_operands = 0 : i64, tpu.core_type = #tpu.core_type<tc>, window_params = [{transform_indices = @transform_0, window_bounds = array<i64: 1, 32, 64>}, {transform_indices = @transform_1, window_bounds = array<i64: 1, 8, 512>}, {pipeline_mode = #tpu.pipeline_mode<synchronous>, transform_indices = @transform_2, window_bounds = array<i64: 512, 40>}, {pipeline_mode = #tpu.pipeline_mode<synchronous>, transform_indices = @transform_3, window_bounds = array<i64: 1, 40>}, {pipeline_mode = #tpu.pipeline_mode<synchronous>, transform_indices = @transform_4, window_bounds = array<i64: 32, 40>}, {pipeline_mode = #tpu.pipeline_mode<synchronous>, transform_indices = @transform_5, window_bounds = array<i64: 1, 40>}, {pipeline_mode = #tpu.pipeline_mode<synchronous>, transform_indices = @transform_6, window_bounds = array<i64: 1, 32>}, {pipeline_mode = #tpu.pipeline_mode<synchronous>, transform_indices = @transform_7, window_bounds = array<i64: 1, 32>}, {pipeline_mode = #tpu.pipeline_mode<synchronous>, transform_indices = @transform_8, window_bounds = array<i64: 64, 32>}, {pipeline_mode = #tpu.pipeline_mode<synchronous>, transform_indices = @transform_9, window_bounds = array<i64: 64, 32>}, {transform_indices = @transform_10, window_bounds = array<i64: 1, 64, 32>}]} {
    %c0 = arith.constant 0 : index
    %c0_0 = arith.constant 0 : index
    %c0_1 = arith.constant 0 : index
    %0 = vector.load %arg1[%c0, %c0_0, %c0_1] : memref<1x32x64xf32, #tpu.memory_space<vmem>>, vector<1x32x64xf32>
    %1 = vector.shape_cast %0 : vector<1x32x64xf32> to vector<32x64xf32>
    %2 = tpu.transpose %1, [1, 0] : vector<32x64xf32> -> vector<64x32xf32>
    %3 = arith.truncf %2 : vector<64x32xf32> to vector<64x32xbf16>
    %c0_2 = arith.constant 0 : index
    %c0_3 = arith.constant 0 : index
    %c0_4 = arith.constant 0 : index
    %4 = vector.load %arg2[%c0_2, %c0_3, %c0_4] : memref<1x8x512xbf16, #tpu.memory_space<vmem>>, vector<1x8x512xbf16>
    %5 = vector.shape_cast %4 : vector<1x8x512xbf16> to vector<8x512xbf16>
    %c0_5 = arith.constant 0 : index
    %c0_6 = arith.constant 0 : index
    %6 = vector.load %arg3[%c0_5, %c0_6] : memref<512x40xbf16, #tpu.memory_space<vmem>>, vector<512x40xbf16>
    %cst = arith.constant dense<0.000000e+00> : vector<8x40xf32>
    %7 = tpu.matmul %5, %6, %cst {dimension_numbers = #tpu.dot_dimension_numbers<[1], [0], [0], [1], [0, 0, 1, 1], [], []>} : vector<8x512xbf16>, vector<512x40xbf16>, vector<8x40xf32> -> vector<8x40xf32>
    %c0_7 = arith.constant 0 : index
    %c0_8 = arith.constant 0 : index
    %8 = vector.load %arg4[%c0_7, %c0_8] : memref<1x40xf32, #tpu.memory_space<vmem>>, vector<1x40xf32>
    %9 = vector.broadcast %8 : vector<1x40xf32> to vector<8x40xf32>
    %10 = arith.addf %7, %9 : vector<8x40xf32>
    %11 = vector.extract_strided_slice %10 {offsets = [0, 0], sizes = [8, 32], strides = [1, 1]} : vector<8x40xf32> to vector<8x32xf32>
    %12 = vector.extract_strided_slice %10 {offsets = [0, 32], sizes = [8, 8], strides = [1, 1]} : vector<8x40xf32> to vector<8x8xf32>
    %c0_9 = arith.constant 0 : index
    %c0_10 = arith.constant 0 : index
    %13 = vector.load %arg5[%c0_9, %c0_10] : memref<32x40xbf16, #tpu.memory_space<vmem>>, vector<32x40xbf16>
    %cst_11 = arith.constant dense<0.000000e+00> : vector<64x40xf32>
    %14 = tpu.matmul %3, %13, %cst_11 {dimension_numbers = #tpu.dot_dimension_numbers<[1], [0], [0], [1], [0, 0, 1, 1], [], []>} : vector<64x32xbf16>, vector<32x40xbf16>, vector<64x40xf32> -> vector<64x40xf32>
    %c0_12 = arith.constant 0 : index
    %c0_13 = arith.constant 0 : index
    %15 = vector.load %arg6[%c0_12, %c0_13] : memref<1x40xf32, #tpu.memory_space<vmem>>, vector<1x40xf32>
    %16 = vector.broadcast %15 : vector<1x40xf32> to vector<64x40xf32>
    %17 = arith.addf %14, %16 : vector<64x40xf32>
    %18 = vector.extract_strided_slice %17 {offsets = [0, 0], sizes = [64, 8], strides = [1, 1]} : vector<64x40xf32> to vector<64x8xf32>
    %19 = vector.extract_strided_slice %17 {offsets = [0, 8], sizes = [64, 32], strides = [1, 1]} : vector<64x40xf32> to vector<64x32xf32>
    %20 = arith.truncf %18 : vector<64x8xf32> to vector<64x8xbf16>
    %21 = arith.truncf %12 : vector<8x8xf32> to vector<8x8xbf16>
    %cst_14 = arith.constant dense<0.000000e+00> : vector<64x8xf32>
    %22 = tpu.matmul %20, %21, %cst_14 {dimension_numbers = #tpu.dot_dimension_numbers<[1], [1], [0], [0], [0, 0, 1, 0], [], []>} : vector<64x8xbf16>, vector<8x8xbf16>, vector<64x8xf32> -> vector<64x8xf32>
    %cst_15 = arith.constant 0.353553385 : f32
    %23 = vector.broadcast %cst_15 : f32 to vector<64x8xf32>
    %24 = arith.mulf %22, %23 : vector<64x8xf32>
    %cst_16 = arith.constant dense<0xFF800000> : vector<64xf32>
    %25 = vector.multi_reduction <maximumf>, %24, %cst_16 [1] : vector<64x8xf32> to vector<64xf32>
    %26 = vector.shape_cast %25 : vector<64xf32> to vector<64x1xf32>
    %27 = vector.broadcast %26 : vector<64x1xf32> to vector<64x8xf32>
    %28 = arith.subf %24, %27 : vector<64x8xf32>
    %29 = math.exp %28 : vector<64x8xf32>
    %cst_17 = arith.constant dense<0.000000e+00> : vector<64xf32>
    %30 = vector.multi_reduction <add>, %29, %cst_17 [1] : vector<64x8xf32> to vector<64xf32>
    %31 = vector.shape_cast %30 : vector<64xf32> to vector<64x1xf32>
    %32 = tpu.reciprocal %31 {approx = true} : vector<64x1xf32> -> vector<64x1xf32>
    %33 = vector.broadcast %32 : vector<64x1xf32> to vector<64x8xf32>
    %34 = arith.mulf %29, %33 : vector<64x8xf32>
    %35 = arith.truncf %34 : vector<64x8xf32> to vector<64x8xbf16>
    %36 = arith.truncf %11 : vector<8x32xf32> to vector<8x32xbf16>
    %cst_18 = arith.constant dense<0.000000e+00> : vector<64x32xf32>
    %37 = tpu.matmul %35, %36, %cst_18 {dimension_numbers = #tpu.dot_dimension_numbers<[1], [0], [0], [1], [0, 0, 1, 1], [], []>} : vector<64x8xbf16>, vector<8x32xbf16>, vector<64x32xf32> -> vector<64x32xf32>
    %38 = arith.addf %37, %2 : vector<64x32xf32>
    %cst_19 = arith.constant dense<0.000000e+00> : vector<64xf32>
    %39 = vector.multi_reduction <add>, %38, %cst_19 [1] : vector<64x32xf32> to vector<64xf32>
    %40 = vector.shape_cast %39 : vector<64xf32> to vector<64x1xf32>
    %cst_20 = arith.constant 3.200000e+01 : f32
    %41 = vector.broadcast %cst_20 : f32 to vector<64x1xf32>
    %42 = arith.divf %40, %41 : vector<64x1xf32>
    %43 = vector.broadcast %42 : vector<64x1xf32> to vector<64x32xf32>
    %44 = arith.subf %38, %43 : vector<64x32xf32>
    %45 = arith.mulf %44, %44 : vector<64x32xf32>
    %cst_21 = arith.constant dense<0.000000e+00> : vector<64xf32>
    %46 = vector.multi_reduction <add>, %45, %cst_21 [1] : vector<64x32xf32> to vector<64xf32>
    %47 = vector.shape_cast %46 : vector<64xf32> to vector<64x1xf32>
    %cst_22 = arith.constant 3.200000e+01 : f32
    %48 = vector.broadcast %cst_22 : f32 to vector<64x1xf32>
    %49 = arith.divf %47, %48 : vector<64x1xf32>
    %50 = vector.broadcast %42 : vector<64x1xf32> to vector<64x32xf32>
    %51 = arith.subf %38, %50 : vector<64x32xf32>
    %cst_23 = arith.constant 9.99999974E-6 : f32
    %52 = vector.broadcast %cst_23 : f32 to vector<64x1xf32>
    %53 = arith.addf %49, %52 : vector<64x1xf32>
    %54 = math.rsqrt %53 : vector<64x1xf32>
    %55 = vector.broadcast %54 : vector<64x1xf32> to vector<64x32xf32>
    %56 = arith.mulf %51, %55 : vector<64x32xf32>
    %c0_24 = arith.constant 0 : index
    %c0_25 = arith.constant 0 : index
    %57 = vector.load %arg7[%c0_24, %c0_25] : memref<1x32xf32, #tpu.memory_space<vmem>>, vector<1x32xf32>
    %58 = vector.broadcast %57 : vector<1x32xf32> to vector<64x32xf32>
    %59 = arith.mulf %56, %58 : vector<64x32xf32>
    %c0_26 = arith.constant 0 : index
    %c0_27 = arith.constant 0 : index
    %60 = vector.load %arg8[%c0_26, %c0_27] : memref<1x32xf32, #tpu.memory_space<vmem>>, vector<1x32xf32>
    %61 = vector.broadcast %60 : vector<1x32xf32> to vector<64x32xf32>
    %62 = arith.addf %59, %61 : vector<64x32xf32>
    %63 = arith.truncf %62 : vector<64x32xf32> to vector<64x32xbf16>
    %64 = arith.truncf %19 : vector<64x32xf32> to vector<64x32xbf16>
    %cst_28 = arith.constant dense<0.000000e+00> : vector<64x64xf32>
    %65 = tpu.matmul %63, %64, %cst_28 {dimension_numbers = #tpu.dot_dimension_numbers<[1], [1], [0], [0], [0, 0, 1, 0], [], []>} : vector<64x32xbf16>, vector<64x32xbf16>, vector<64x64xf32> -> vector<64x64xf32>
    %cst_29 = arith.constant 0.176776692 : f32
    %66 = vector.broadcast %cst_29 : f32 to vector<64x64xf32>
    %67 = arith.mulf %65, %66 : vector<64x64xf32>
    %cst_30 = arith.constant dense<0xFF800000> : vector<64xf32>
    %68 = vector.multi_reduction <maximumf>, %67, %cst_30 [1] : vector<64x64xf32> to vector<64xf32>
    %69 = vector.shape_cast %68 : vector<64xf32> to vector<64x1xf32>
    %70 = vector.broadcast %69 : vector<64x1xf32> to vector<64x64xf32>
    %71 = arith.subf %67, %70 : vector<64x64xf32>
    %72 = math.exp %71 : vector<64x64xf32>
    %cst_31 = arith.constant dense<0.000000e+00> : vector<64xf32>
    %73 = vector.multi_reduction <add>, %72, %cst_31 [1] : vector<64x64xf32> to vector<64xf32>
    %74 = vector.shape_cast %73 : vector<64xf32> to vector<64x1xf32>
    %75 = tpu.reciprocal %74 {approx = true} : vector<64x1xf32> -> vector<64x1xf32>
    %76 = vector.broadcast %75 : vector<64x1xf32> to vector<64x64xf32>
    %77 = arith.mulf %72, %76 : vector<64x64xf32>
    %78 = arith.truncf %77 : vector<64x64xf32> to vector<64x64xbf16>
    %79 = arith.truncf %2 : vector<64x32xf32> to vector<64x32xbf16>
    %cst_32 = arith.constant dense<0.000000e+00> : vector<64x32xf32>
    %80 = tpu.matmul %78, %79, %cst_32 {dimension_numbers = #tpu.dot_dimension_numbers<[1], [0], [0], [1], [0, 0, 1, 1], [], []>} : vector<64x64xbf16>, vector<64x32xbf16>, vector<64x32xf32> -> vector<64x32xf32>
    %81 = vector.shape_cast %80 : vector<64x32xf32> to vector<1x64x32xf32>
    %cst_33 = arith.constant dense<0.000000e+00> : vector<1xf32>
    %82 = vector.multi_reduction <add>, %81, %cst_33 [1, 2] : vector<1x64x32xf32> to vector<1xf32>
    %83 = vector.shape_cast %82 : vector<1xf32> to vector<1x1x1xf32>
    %84 = vector.extract %83[0, 0, 0] : f32 from vector<1x1x1xf32>
    %cst_34 = arith.constant 2.048000e+03 : f32
    %85 = arith.divf %84, %cst_34 : f32
    %86 = vector.broadcast %85 : f32 to vector<64x32xf32>
    %87 = arith.subf %80, %86 : vector<64x32xf32>
    %88 = arith.mulf %87, %87 : vector<64x32xf32>
    %89 = vector.shape_cast %88 : vector<64x32xf32> to vector<1x64x32xf32>
    %cst_35 = arith.constant dense<0.000000e+00> : vector<1xf32>
    %90 = vector.multi_reduction <add>, %89, %cst_35 [1, 2] : vector<1x64x32xf32> to vector<1xf32>
    %91 = vector.shape_cast %90 : vector<1xf32> to vector<1x1x1xf32>
    %92 = vector.extract %91[0, 0, 0] : f32 from vector<1x1x1xf32>
    %cst_36 = arith.constant 2.048000e+03 : f32
    %93 = arith.divf %92, %cst_36 : f32
    %94 = vector.broadcast %85 : f32 to vector<64x32xf32>
    %95 = arith.subf %80, %94 : vector<64x32xf32>
    %cst_37 = arith.constant 9.99999974E-6 : f32
    %96 = arith.addf %93, %cst_37 : f32
    %97 = math.rsqrt %96 : f32
    %98 = vector.broadcast %97 : f32 to vector<64x32xf32>
    %99 = arith.mulf %95, %98 : vector<64x32xf32>
    %c0_38 = arith.constant 0 : index
    %c0_39 = arith.constant 0 : index
    %100 = vector.load %arg9[%c0_38, %c0_39] : memref<64x32xf32, #tpu.memory_space<vmem>>, vector<64x32xf32>
    %101 = arith.mulf %99, %100 : vector<64x32xf32>
    %c0_40 = arith.constant 0 : index
    %c0_41 = arith.constant 0 : index
    %102 = vector.load %arg10[%c0_40, %c0_41] : memref<64x32xf32, #tpu.memory_space<vmem>>, vector<64x32xf32>
    %103 = arith.addf %101, %102 : vector<64x32xf32>
    %c0_42 = arith.constant 0 : index
    %c0_43 = arith.constant 0 : index
    %c0_44 = arith.constant 0 : index
    %104 = vector.load %arg11[%c0_42, %c0_43, %c0_44] : memref<1x64x32xf32, #tpu.memory_space<vmem>>, vector<1x64x32xf32>
    %105 = vector.shape_cast %104 : vector<1x64x32xf32> to vector<64x32xf32>
    %106 = vector.shape_cast %103 : vector<64x32xf32> to vector<1x64x32xf32>
    tpu.vector_store %arg11[%c0_42, %c0_43, %c0_44], %106 {strides = array<i32>} : memref<1x64x32xf32, #tpu.memory_space<vmem>>, vector<1x64x32xf32>,
    return
  }
  func.func @transform_0(%arg0: i32) -> (i32, i32, i32) {
    %c0_i32 = arith.constant 0 : i32
    %c0_i32_0 = arith.constant 0 : i32
    %c0_i32_1 = arith.constant 0 : i32
    return %arg0, %c0_i32, %c0_i32_0 : i32, i32, i32
  }
  func.func @transform_1(%arg0: i32) -> (i32, i32, i32) {
    %c0_i32 = arith.constant 0 : i32
    %c0_i32_0 = arith.constant 0 : i32
    %c0_i32_1 = arith.constant 0 : i32
    return %arg0, %c0_i32, %c0_i32_0 : i32, i32, i32
  }
  func.func @transform_2(%arg0: i32) -> (i32, i32) {
    %c0_i32 = arith.constant 0 : i32
    %c0_i32_0 = arith.constant 0 : i32
    %c0_i32_1 = arith.constant 0 : i32
    return %c0_i32, %c0_i32_0 : i32, i32
  }
  func.func @transform_3(%arg0: i32) -> (i32, i32) {
    %c0_i32 = arith.constant 0 : i32
    %c0_i32_0 = arith.constant 0 : i32
    %c0_i32_1 = arith.constant 0 : i32
    return %c0_i32, %c0_i32_0 : i32, i32
  }
  func.func @transform_4(%arg0: i32) -> (i32, i32) {
    %c0_i32 = arith.constant 0 : i32
    %c0_i32_0 = arith.constant 0 : i32
    %c0_i32_1 = arith.constant 0 : i32
    return %c0_i32, %c0_i32_0 : i32, i32
  }
  func.func @transform_5(%arg0: i32) -> (i32, i32) {
    %c0_i32 = arith.constant 0 : i32
    %c0_i32_0 = arith.constant 0 : i32
    %c0_i32_1 = arith.constant 0 : i32
    return %c0_i32, %c0_i32_0 : i32, i32
  }
  func.func @transform_6(%arg0: i32) -> (i32, i32) {
    %c0_i32 = arith.constant 0 : i32
    %c0_i32_0 = arith.constant 0 : i32
    %c0_i32_1 = arith.constant 0 : i32
    return %c0_i32, %c0_i32_0 : i32, i32
  }
  func.func @transform_7(%arg0: i32) -> (i32, i32) {
    %c0_i32 = arith.constant 0 : i32
    %c0_i32_0 = arith.constant 0 : i32
    %c0_i32_1 = arith.constant 0 : i32
    return %c0_i32, %c0_i32_0 : i32, i32
  }
  func.func @transform_8(%arg0: i32) -> (i32, i32) {
    %c0_i32 = arith.constant 0 : i32
    %c0_i32_0 = arith.constant 0 : i32
    %c0_i32_1 = arith.constant 0 : i32
    return %c0_i32, %c0_i32_0 : i32, i32
  }
  func.func @transform_9(%arg0: i32) -> (i32, i32) {
    %c0_i32 = arith.constant 0 : i32
    %c0_i32_0 = arith.constant 0 : i32
    %c0_i32_1 = arith.constant 0 : i32
    return %c0_i32, %c0_i32_0 : i32, i32
  }
  func.func @transform_10(%arg0: i32) -> (i32, i32, i32) {
    %c0_i32 = arith.constant 0 : i32
    %c0_i32_0 = arith.constant 0 : i32
    %c0_i32_1 = arith.constant 0 : i32
    return %arg0, %c0_i32, %c0_i32_0 : i32, i32, i32
  }
}

</mosaic_0001>

<llo_original>
// kernel: ftt_forward.1
$region0: #{ftt_forward.1}
  #allocation0 [shape = 'u32[]', space=smem, size = 0x4, offset = 0x4, fixed_abs, tag = 'smem constant byte address 0x4 - core index']
  #allocation1 [shape = 'u32[144,128]{1,0:T(1,128)}', space=vmem, size = 0x12000, scoped, tag = 'internal scratch']
  %s0 = inlined_call_operand.vmem [shape: f32[2,32,64], index: 0, kind: input, shape index: {}]
  %s1 = inlined_call_operand.vmem [shape: bf16[2,8,512], index: 1, kind: input, shape index: {}]
  %s2 = inlined_call_operand.vmem [shape: bf16[512,40], index: 2, kind: input, shape index: {}]
  %s3 = inlined_call_operand.vmem [shape: f32[1,40], index: 3, kind: input, shape index: {}]
  %s4 = inlined_call_operand.vmem [shape: bf16[32,40], index: 4, kind: input, shape index: {}]
  %s5 = inlined_call_operand.vmem [shape: f32[1,40], index: 5, kind: input, shape index: {}]
  %s6 = inlined_call_operand.vmem [shape: f32[1,32], index: 6, kind: input, shape index: {}]
  %s7 = inlined_call_operand.vmem [shape: f32[1,32], index: 7, kind: input, shape index: {}]
  %s8 = inlined_call_operand.vmem [shape: f32[64,32], index: 8, kind: input, shape index: {}]
  %s9 = inlined_call_operand.vmem [shape: f32[64,32], index: 9, kind: input, shape index: {}]
  %s10 = inlined_call_operand.vmem [shape: f32[2,64,32], index: 10, kind: output, shape index: {}]
  %s11 = sld [smem:[#allocation0]]
  $region73: #{ftt_forward.1} parent=0
    _
  %s13 = ssub.s32 1, %s11
  %s14 = scalar_select 0, %s13, %s11
  loop: start=0, step=1, limit=4
  $region2: #{ftt_forward.1} parent=0 // loop_pre_header
    _
  $region3: #{ftt_forward.1} parent=0 // loop_header
    %s16 = sphi 0, %s20
    %p17 = scmp.ge.s32.totalorder %s16, 4
    %s26 = sphi 0, %s28
    %s29 = sphi 0, %s26
    %s30 = sphi 0, %s29
    %s46 = sphi 0, %s30
    %s52 = sphi 0, %s54
    %s55 = sphi 0, %s52
    %s56 = sphi 0, %s55
    %s72 = sphi 0, %s56
    %s76 = sphi 0, %s76
    %s78 = sphi 0, %s76
    %s79 = sphi 0, %s78
    %s93 = sphi 0, %s79
    %s97 = sphi 0, %s97
    %s99 = sphi 0, %s97
    %s100 = sphi 0, %s99
    %s114 = sphi 0, %s100
    %s118 = sphi 0, %s118
    %s120 = sphi 0, %s118
    %s121 = sphi 0, %s120
    %s135 = sphi 0, %s121
    %s139 = sphi 0, %s139
    %s141 = sphi 0, %s139
    %s142 = sphi 0, %s141
    %s156 = sphi 0, %s142
    %s160 = sphi 0, %s160
    %s162 = sphi 0, %s160
    %s163 = sphi 0, %s162
    %s177 = sphi 0, %s163
    %s181 = sphi 0, %s181
    %s183 = sphi 0, %s181
    %s184 = sphi 0, %s183
    %s198 = sphi 0, %s184
    %s202 = sphi 0, %s202
    %s204 = sphi 0, %s202
    %s205 = sphi 0, %s204
    %s219 = sphi 0, %s205
    %s223 = sphi 0, %s223
    %s225 = sphi 0, %s223
    %s226 = sphi 0, %s225
    %s240 = sphi 0, %s226
    %s246 = sphi 0, %s248
    %s249 = sphi 0, %s246
    %s250 = sphi 0, %s249
    %s266 = sphi 0, %s250
  $region4: #{ftt_forward.1} parent=0 // loop_header_branch
    %19 = sbr.rel (%p17) target = $region8
  $region5: #{ftt_forward.1} parent=0 // loop_body
    %s21 = ssub.s32 %s16, 1
    %s22 = ssub.s32 %s16, 2
    %s23 = sadd.s32 %s16, 1
    %s24 = ssub.s32 %s16, %s23
    %p25 = scmp.eq.s32.totalorder %s24, 0
    %s27 = sadd.s32 %s26, 1
    %s28 = scalar_select %p25, %s26, %s27
    %p31 = pneg %p25
    %p32 = scmp.eq.s32.totalorder %s16, 1
    %p33 = por %p31, %p32
    %p34 = scmp.ne.s32.totalorder %s26, %s29
    %p35 = scmp.eq.s32.totalorder %s16, 0
    %p36 = por %p34, %p35
    %p37 = scmp.ne.s32.totalorder %s26, %s29
    %p38 = scmp.eq.s32.totalorder %s21, 1
    %p39 = por %p37, %p38
    %p40 = scmp.ne.s32.totalorder %s29, %s30
    %p41 = scmp.eq.s32.totalorder %s21, 0
    %p42 = por %p40, %p41
    %p43 = scmp.ne.s32.totalorder %s29, %s30
    %p44 = scmp.eq.s32.totalorder %s22, 1
    %p45 = por %p43, %p44
    %p47 = scmp.ne.s32.totalorder %s30, %s46
    %p48 = scmp.eq.s32.totalorder %s22, 0
    %p49 = por %p47, %p48
    %s50 = ssub.s32 %s16, %s23
    %p51 = scmp.eq.s32.totalorder %s50, 0
    %s53 = sadd.s32 %s52, 1
    %s54 = scalar_select %p51, %s52, %s53
    %p57 = pneg %p51
    %p58 = scmp.eq.s32.totalorder %s16, 1
    %p59 = por %p57, %p58
    %p60 = scmp.ne.s32.totalorder %s52, %s55
    %p61 = scmp.eq.s32.totalorder %s16, 0
    %p62 = por %p60, %p61
    %p63 = scmp.ne.s32.totalorder %s52, %s55
    %p64 = scmp.eq.s32.totalorder %s21, 1
    %p65 = por %p63, %p64
    %p66 = scmp.ne.s32.totalorder %s55, %s56
    %p67 = scmp.eq.s32.totalorder %s21, 0
    %p68 = por %p66, %p67
    %p69 = scmp.ne.s32.totalorder %s55, %s56
    %p70 = scmp.eq.s32.totalorder %s22, 1
    %p71 = por %p69, %p70
    %p73 = scmp.ne.s32.totalorder %s56, %s72
    %p74 = scmp.eq.s32.totalorder %s22, 0
    %p75 = por %p73, %p74
    %s77 = sadd.s32 %s76, 1
    %p80 = scmp.eq.s32.totalorder %s16, 1
    %p81 = scmp.ne.s32.totalorder %s76, %s78
    %p82 = scmp.eq.s32.totalorder %s16, 0
    %p83 = por %p81, %p82
    %p84 = scmp.ne.s32.totalorder %s76, %s78
    %p85 = scmp.eq.s32.totalorder %s21, 1
    %p86 = por %p84, %p85
    %p87 = scmp.ne.s32.totalorder %s78, %s79
    %p88 = scmp.eq.s32.totalorder %s21, 0
    %p89 = por %p87, %p88
    %p90 = scmp.ne.s32.totalorder %s78, %s79
    %p91 = scmp.eq.s32.totalorder %s22, 1
    %p92 = por %p90, %p91
    %p94 = scmp.ne.s32.totalorder %s79, %s93
    %p95 = scmp.eq.s32.totalorder %s22, 0
    %p96 = por %p94, %p95
    %s98 = sadd.s32 %s97, 1
    %p101 = scmp.eq.s32.totalorder %s16, 1
    %p102 = scmp.ne.s32.totalorder %s97, %s99
    %p103 = scmp.eq.s32.totalorder %s16, 0
    %p104 = por %p102, %p103
    %p105 = scmp.ne.s32.totalorder %s97, %s99
    %p106 = scmp.eq.s32.totalorder %s21, 1
    %p107 = por %p105, %p106
    %p108 = scmp.ne.s32.totalorder %s99, %s100
    %p109 = scmp.eq.s32.totalorder %s21, 0
    %p110 = por %p108, %p109
    %p111 = scmp.ne.s32.totalorder %s99, %s100
    %p112 = scmp.eq.s32.totalorder %s22, 1
    %p113 = por %p111, %p112
    %p115 = scmp.ne.s32.totalorder %s100, %s114
    %p116 = scmp.eq.s32.totalorder %s22, 0
    %p117 = por %p115, %p116
    %s119 = sadd.s32 %s118, 1
    %p122 = scmp.eq.s32.totalorder %s16, 1
    %p123 = scmp.ne.s32.totalorder %s118, %s120
    %p124 = scmp.eq.s32.totalorder %s16, 0
    %p125 = por %p123, %p124
    %p126 = scmp.ne.s32.totalorder %s118, %s120
    %p127 = scmp.eq.s32.totalorder %s21, 1
    %p128 = por %p126, %p127
    %p129 = scmp.ne.s32.totalorder %s120, %s121
    %p130 = scmp.eq.s32.totalorder %s21, 0
    %p131 = por %p129, %p130
    %p132 = scmp.ne.s32.totalorder %s120, %s121
    %p133 = scmp.eq.s32.totalorder %s22, 1
    %p134 = por %p132, %p133
    %p136 = scmp.ne.s32.totalorder %s121, %s135
    %p137 = scmp.eq.s32.totalorder %s22, 0
    %p138 = por %p136, %p137
    %s140 = sadd.s32 %s139, 1
    %p143 = scmp.eq.s32.totalorder %s16, 1
    %p144 = scmp.ne.s32.totalorder %s139, %s141
    %p145 = scmp.eq.s32.totalorder %s16, 0
    %p146 = por %p144, %p145
    %p147 = scmp.ne.s32.totalorder %s139, %s141
    %p148 = scmp.eq.s32.totalorder %s21, 1
    %p149 = por %p147, %p148
    %p150 = scmp.ne.s32.totalorder %s141, %s142
    %p151 = scmp.eq.s32.totalorder %s21, 0
    %p152 = por %p150, %p151
    %p153 = scmp.ne.s32.totalorder %s141, %s142
    %p154 = scmp.eq.s32.totalorder %s22, 1
    %p155 = por %p153, %p154
    %p157 = scmp.ne.s32.totalorder %s142, %s156
    %p158 = scmp.eq.s32.totalorder %s22, 0
    %p159 = por %p157, %p158
    %s161 = sadd.s32 %s160, 1
    %p164 = scmp.eq.s32.totalorder %s16, 1
    %p165 = scmp.ne.s32.totalorder %s160, %s162
    %p166 = scmp.eq.s32.totalorder %s16, 0
    %p167 = por %p165, %p166
    %p168 = scmp.ne.s32.totalorder %s160, %s162
    %p169 = scmp.eq.s32.totalorder %s21, 1
    %p170 = por %p168, %p169
    %p171 = scmp.ne.s32.totalorder %s162, %s163
    %p172 = scmp.eq.s32.totalorder %s21, 0
    %p173 = por %p171, %p172
    %p174 = scmp.ne.s32.totalorder %s162, %s163
    %p175 = scmp.eq.s32.totalorder %s22, 1
    %p176 = por %p174, %p175
    %p178 = scmp.ne.s32.totalorder %s163, %s177
    %p179 = scmp.eq.s32.totalorder %s22, 0
    %p180 = por %p178, %p179
    %s182 = sadd.s32 %s181, 1
    %p185 = scmp.eq.s32.totalorder %s16, 1
    %p186 = scmp.ne.s32.totalorder %s181, %s183
    %p187 = scmp.eq.s32.totalorder %s16, 0
    %p188 = por %p186, %p187
    %p189 = scmp.ne.s32.totalorder %s181, %s183
    %p190 = scmp.eq.s32.totalorder %s21, 1
    %p191 = por %p189, %p190
    %p192 = scmp.ne.s32.totalorder %s183, %s184
    %p193 = scmp.eq.s32.totalorder %s21, 0
    %p194 = por %p192, %p193
    %p195 = scmp.ne.s32.totalorder %s183, %s184
    %p196 = scmp.eq.s32.totalorder %s22, 1
    %p197 = por %p195, %p196
    %p199 = scmp.ne.s32.totalorder %s184, %s198
    %p200 = scmp.eq.s32.totalorder %s22, 0
    %p201 = por %p199, %p200
    %s203 = sadd.s32 %s202, 1
    %p206 = scmp.eq.s32.totalorder %s16, 1
    %p207 = scmp.ne.s32.totalorder %s202, %s204
    %p208 = scmp.eq.s32.totalorder %s16, 0
    %p209 = por %p207, %p208
    %p210 = scmp.ne.s32.totalorder %s202, %s204
    %p211 = scmp.eq.s32.totalorder %s21, 1
    %p212 = por %p210, %p211
    %p213 = scmp.ne.s32.totalorder %s204, %s205
    %p214 = scmp.eq.s32.totalorder %s21, 0
    %p215 = por %p213, %p214
    %p216 = scmp.ne.s32.totalorder %s204, %s205
    %p217 = scmp.eq.s32.totalorder %s22, 1
    %p218 = por %p216, %p217
    %p220 = scmp.ne.s32.totalorder %s205, %s219
    %p221 = scmp.eq.s32.totalorder %s22, 0
    %p222 = por %p220, %p221
    %s224 = sadd.s32 %s223, 1
    %p227 = scmp.eq.s32.totalorder %s16, 1
    %p228 = scmp.ne.s32.totalorder %s223, %s225
    %p229 = scmp.eq.s32.totalorder %s16, 0
    %p230 = por %p228, %p229
    %p231 = scmp.ne.s32.totalorder %s223, %s225
    %p232 = scmp.eq.s32.totalorder %s21, 1
    %p233 = por %p231, %p232
    %p234 = scmp.ne.s32.totalorder %s225, %s226
    %p235 = scmp.eq.s32.totalorder %s21, 0
    %p236 = por %p234, %p235
    %p237 = scmp.ne.s32.totalorder %s225, %s226
    %p238 = scmp.eq.s32.totalorder %s22, 1
    %p239 = por %p237, %p238
    %p241 = scmp.ne.s32.totalorder %s226, %s240
    %p242 = scmp.eq.s32.totalorder %s22, 0
    %p243 = por %p241, %p242
    %s244 = ssub.s32 %s16, %s23
    %p245 = scmp.eq.s32.totalorder %s244, 0
    %s247 = sadd.s32 %s246, 1
    %s248 = scalar_select %p245, %s246, %s247
    %p251 = pneg %p245
    %p252 = scmp.eq.s32.totalorder %s16, 1
    %p253 = por %p251, %p252
    %p254 = scmp.ne.s32.totalorder %s246, %s249
    %p255 = scmp.eq.s32.totalorder %s16, 0
    %p256 = por %p254, %p255
    %p257 = scmp.ne.s32.totalorder %s246, %s249
    %p258 = scmp.eq.s32.totalorder %s21, 1
    %p259 = por %p257, %p258
    %p260 = scmp.ne.s32.totalorder %s249, %s250
    %p261 = scmp.eq.s32.totalorder %s21, 0
    %p262 = por %p260, %p261
    %p263 = scmp.ne.s32.totalorder %s249, %s250
    %p264 = scmp.eq.s32.totalorder %s22, 1
    %p265 = por %p263, %p264
    %p267 = scmp.ne.s32.totalorder %s250, %s266
    %p268 = scmp.eq.s32.totalorder %s22, 0
    %p269 = por %p267, %p268
    %p270 = scmp.le.s32.totalorder 1, %s16
    %p271 = scmp.lt.s32.totalorder %s16, 3
    %p272 = pnand %p270, %p271
    %p273 = pneg %p272
    // Predicated region
    $region9: #{ftt_forward.1} parent=5 // pred_check
      _
    $region10: #{ftt_forward.1} parent=5 // pred_check_branch
      %275 = sbr.rel (%p272) target = $region12
    $region11: #{ftt_forward.1} parent=5 // pred_region
      %s276 = ssub.s32 %s16, 1
      // Predicated region
      $region13: #{ftt_forward.1} parent=11 // pred_check
        %p277 = pneg %p89
      $region14: #{ftt_forward.1} parent=11 // pred_check_branch
        %279 = sbr.rel (%p277) target = $region16
      $region15: #{ftt_forward.1} parent=11 // pred_region
        _
      $region16: #{ftt_forward.1} parent=11 // pred_fallthru
        _
      // Predicated region
      $region17: #{ftt_forward.1} parent=11 // pred_check
        %p280 = pneg %p110
      $region18: #{ftt_forward.1} parent=11 // pred_check_branch
        %282 = sbr.rel (%p280) target = $region20
      $region19: #{ftt_forward.1} parent=11 // pred_region
        _
      $region20: #{ftt_forward.1} parent=11 // pred_fallthru
        _
      // Predicated region
      $region21: #{ftt_forward.1} parent=11 // pred_check
        %p283 = pneg %p131
      $region22: #{ftt_forward.1} parent=11 // pred_check_branch
        %285 = sbr.rel (%p283) target = $region24
      $region23: #{ftt_forward.1} parent=11 // pred_region
        _
      $region24: #{ftt_forward.1} parent=11 // pred_fallthru
        _
      // Predicated region
      $region25: #{ftt_forward.1} parent=11 // pred_check
        %p286 = pneg %p152
      $region26: #{ftt_forward.1} parent=11 // pred_check_branch
        %288 = sbr.rel (%p286) target = $region28
      $region27: #{ftt_forward.1} parent=11 // pred_region
        _
      $region28: #{ftt_forward.1} parent=11 // pred_fallthru
        _
      // Predicated region
      $region29: #{ftt_forward.1} parent=11 // pred_check
        %p289 = pneg %p173
      $region30: #{ftt_forward.1} parent=11 // pred_check_branch
        %291 = sbr.rel (%p289) target = $region32
      $region31: #{ftt_forward.1} parent=11 // pred_region
        _
      $region32: #{ftt_forward.1} parent=11 // pred_fallthru
        _
      // Predicated region
      $region33: #{ftt_forward.1} parent=11 // pred_check
        %p292 = pneg %p194
      $region34: #{ftt_forward.1} parent=11 // pred_check_branch
        %294 = sbr.rel (%p292) target = $region36
      $region35: #{ftt_forward.1} parent=11 // pred_region
        _
      $region36: #{ftt_forward.1} parent=11 // pred_fallthru
        _
      // Predicated region
      $region37: #{ftt_forward.1} parent=11 // pred_check
        %p295 = pneg %p215
      $region38: #{ftt_forward.1} parent=11 // pred_check_branch
        %297 = sbr.rel (%p295) target = $region40
      $region39: #{ftt_forward.1} parent=11 // pred_region
        _
      $region40: #{ftt_forward.1} parent=11 // pred_fallthru
        _
      // Predicated region
      $region41: #{ftt_forward.1} parent=11 // pred_check
        %p298 = pneg %p236
      $region42: #{ftt_forward.1} parent=11 // pred_check_branch
        %300 = sbr.rel (%p298) target = $region44
      $region43: #{ftt_forward.1} parent=11 // pred_region
        _
      $region44: #{ftt_forward.1} parent=11 // pred_fallthru
        _
    $region12: #{ftt_forward.1} parent=5 // pred_fallthru
      _
    %p301 = scmp.lt.s32.totalorder %s16, 2
    // Predicated region
    $region45: #{ftt_forward.1} parent=5 // pred_check
      %p302 = pneg %p301
    $region46: #{ftt_forward.1} parent=5 // pred_check_branch
      %304 = sbr.rel (%p302) target = $region48
    $region47: #{ftt_forward.1} parent=5 // pred_region
      // Predicated region
      $region49: #{ftt_forward.1} parent=47 // pred_check
        %p305 = pneg %p36
      $region50: #{ftt_forward.1} parent=47 // pred_check_branch
        %307 = sbr.rel (%p305) target = $region52
      $region51: #{ftt_forward.1} parent=47 // pred_region
        %p308 = scmp.lt.s32.totalorder %s16, 1
        %s309 = scalar_select %p308, %s16, 1
        %s310 = smul.addr %s309, 4
        %s311 = smul.addr %s310, 8
        %s312 = scalar_lea.vmem %s0, %s311
      $region52: #{ftt_forward.1} parent=47 // pred_fallthru
        _
      // Predicated region
      $region53: #{ftt_forward.1} parent=47 // pred_check
        %p313 = pneg %p62
      $region54: #{ftt_forward.1} parent=47 // pred_check_branch
        %315 = sbr.rel (%p313) target = $region56
      $region55: #{ftt_forward.1} parent=47 // pred_region
        %p316 = scmp.lt.s32.totalorder %s16, 1
        %s317 = scalar_select %p316, %s16, 1
        %s318 = smul.addr %s317, 4
        %s319 = smul.addr %s318, 4
        %s320 = scalar_lea.vmem %s1, %s319
      $region56: #{ftt_forward.1} parent=47 // pred_fallthru
        _
    $region48: #{ftt_forward.1} parent=5 // pred_fallthru
      _
    %p321 = scmp.le.s32.totalorder 1, %s16
    %p322 = scmp.lt.s32.totalorder %s16, 3
    %p323 = pnand %p321, %p322
    %p324 = pneg %p323
    // Predicated region
    $region57: #{ftt_forward.1} parent=5 // pred_check
      _
    $region58: #{ftt_forward.1} parent=5 // pred_check_branch
      %326 = sbr.rel (%p323) target = $region60
    $region59: #{ftt_forward.1} parent=5 // pred_region
      %s327 = ssub.s32 %s16, 1
      %p328 = scmp.lt.s32.totalorder %s21, 1
      %s329 = scalar_select %p328, %s21, 1
      %s330 = smul.addr %s329, 4
      %s331 = smul.addr %s330, 8
      %s332 = scalar_lea.vmem %s0, %s331
      %p333 = pneg %p42
      %p334 = pneg %p39
      %p335 = scmp.lt.s32.totalorder %s21, 1
      %s336 = scalar_select %p335, %s21, 1
      %s337 = smul.addr %s336, 4
      %s338 = smul.addr %s337, 4
      %s339 = scalar_lea.vmem %s1, %s338
      %p340 = pneg %p68
      %p341 = pneg %p65
      %p342 = pneg %p89
      %p343 = pneg %p86
      %p344 = pneg %p110
      %p345 = pneg %p107
      %p346 = pneg %p131
      %p347 = pneg %p128
      %p348 = pneg %p152
      %p349 = pneg %p149
      %p350 = pneg %p173
      %p351 = pneg %p170
      %p352 = pneg %p194
      %p353 = pneg %p191
      %p354 = pneg %p215
      %p355 = pneg %p212
      %p356 = pneg %p236
      %p357 = pneg %p233
      %p358 = pneg %p262
      %p359 = pneg %p259
      %p360 = scmp.lt.s32.totalorder %s21, 1
      %s361 = scalar_select %p360, %s21, 1
      %s362 = smul.addr %s361, 8
      %s363 = smul.addr %s362, 8
      %s364 = scalar_lea.vmem %s10, %s363
      %p365 = scmp.lt.s32.totalorder %s21, 1
      %s366 = scalar_select %p365, %s21, 1
      %s367 = smul.addr %s366, 4
      %s368 = smul.addr %s367, 8
      %s369 = scalar_lea.vmem %s0, %s368
      %p370 = scmp.lt.s32.totalorder %s21, 1
      %s371 = scalar_select %p370, %s21, 1
      %s372 = smul.addr %s371, 4
      %s373 = smul.addr %s372, 4
      %s374 = scalar_lea.vmem %s1, %s373
      %p375 = scmp.lt.s32.totalorder %s21, 1
      %s376 = scalar_select %p375, %s21, 1
      %s377 = smul.addr %s376, 8
      %s378 = smul.addr %s377, 8
      %s379 = scalar_lea.vmem %s10, %s378
      %v381 = vld [vmem:[%s369] sm:$0xff]
      %v382 = vld [vmem:[%s369 + $0x8] sm:$0xff]
      %v383 = vld [vmem:[%s369 + $0x10] sm:$0xff]
      %v384 = vld [vmem:[%s369 + $0x18] sm:$0xff]
      %385 = vxpose.xlu0.b32.start [1/16] %v381, 128
      %386 = vxpose.xlu0.b32.cont [2/16] %v382, 128
      %387 = vxpose.xlu0.b32.cont [3/16] %v383, 128
      %388 = vxpose.xlu0.b32.cont [4/16] %v384, 128
      %389 = vxpose.xlu0.b32.cont [5/16] 0.0, 128
      %390 = vxpose.xlu0.b32.cont [6/16] 0.0, 128
      %391 = vxpose.xlu0.b32.cont [7/16] 0.0, 128
      %392 = vxpose.xlu0.b32.cont [8/16] 0.0, 128
      %393 = vxpose.xlu0.b32.cont [9/16] 0.0, 128
      %394 = vxpose.xlu0.b32.cont [10/16] 0.0, 128
      %395 = vxpose.xlu0.b32.cont [11/16] 0.0, 128
      %396 = vxpose.xlu0.b32.cont [12/16] 0.0, 128
      %397 = vxpose.xlu0.b32.cont [13/16] 0.0, 128
      %398 = vxpose.xlu0.b32.cont [14/16] 0.0, 128
      %399 = vxpose.xlu0.b32.cont [15/16] 0.0, 128
      %400 = vxpose.xlu0.b32.end [16/16] 0.0, 128
      %v401 = vpop.trf.xlu0
      %v402 = vpop.trf.xlu0
      %v403 = vpop.trf.xlu0
      %v404 = vpop.trf.xlu0
      %v405 = vpop.trf.xlu0
      %v406 = vpop.trf.xlu0
      %v407 = vpop.trf.xlu0
      %v408 = vpop.trf.xlu0
      %v409 = vpop.trf.xlu0
      %v410 = vpop.trf.xlu0
      %v411 = vpop.trf.xlu0
      %v412 = vpop.trf.xlu0
      %v413 = vpop.trf.xlu0
      %v414 = vpop.trf.xlu0
      %v415 = vpop.trf.xlu0
      %v416 = vpop.trf.xlu0
      %v417 = vpack.c.bf16 %v402, %v401
      %v418 = vpack.c.bf16 %v404, %v403
      %v419 = vpack.c.bf16 %v406, %v405
      %v420 = vpack.c.bf16 %v408, %v407
      %v421 = vld [vmem:[%s374] sm:$0xff]
      %v422 = vld [vmem:[%s374 + $0x8] sm:$0xff]
      %v423 = vld [vmem:[%s2] sm:$0xf]
      %v424 = vld [vmem:[%s2 + $0x4] sm:$0xf]
      %v425 = vld [vmem:[%s2 + $0x8] sm:$0xf]
      %v426 = vld [vmem:[%s2 + $0xc] sm:$0xf]
      %v427 = vld [vmem:[%s2 + $0x10] sm:$0xf]
      %v428 = vld [vmem:[%s2 + $0x14] sm:$0xf]
      %v429 = vld [vmem:[%s2 + $0x18] sm:$0xf]
      %v430 = vld [vmem:[%s2 + $0x1c] sm:$0xf]
      %v431 = vld [vmem:[%s2 + $0x20] sm:$0xf]
      %v432 = vld [vmem:[%s2 + $0x24] sm:$0xf]
      %v433 = vld [vmem:[%s2 + $0x28] sm:$0xf]
      %v434 = vld [vmem:[%s2 + $0x2c] sm:$0xf]
      %v435 = vld [vmem:[%s2 + $0x30] sm:$0xf]
      %v436 = vld [vmem:[%s2 + $0x34] sm:$0xf]
      %v437 = vld [vmem:[%s2 + $0x38] sm:$0xf]
      %v438 = vld [vmem:[%s2 + $0x3c] sm:$0xf]
      %v439 = vld [vmem:[%s2 + $0x40] sm:$0xf]
      %v440 = vld [vmem:[%s2 + $0x44] sm:$0xf]
      %v441 = vld [vmem:[%s2 + $0x48] sm:$0xf]
      %v442 = vld [vmem:[%s2 + $0x4c] sm:$0xf]
      %v443 = vld [vmem:[%s2 + $0x50] sm:$0xf]
      %v444 = vld [vmem:[%s2 + $0x54] sm:$0xf]
      %v445 = vld [vmem:[%s2 + $0x58] sm:$0xf]
      %v446 = vld [vmem:[%s2 + $0x5c] sm:$0xf]
      %v447 = vld [vmem:[%s2 + $0x60] sm:$0xf]
      %v448 = vld [vmem:[%s2 + $0x64] sm:$0xf]
      %v449 = vld [vmem:[%s2 + $0x68] sm:$0xf]
      %v450 = vld [vmem:[%s2 + $0x6c] sm:$0xf]
      %v451 = vld [vmem:[%s2 + $0x70] sm:$0xf]
      %v452 = vld [vmem:[%s2 + $0x74] sm:$0xf]
      %v453 = vld [vmem:[%s2 + $0x78] sm:$0xf]
      %v454 = vld [vmem:[%s2 + $0x7c] sm:$0xf]
      %v455 = vld [vmem:[%s2 + $0x80] sm:$0xf]
      %v456 = vld [vmem:[%s2 + $0x84] sm:$0xf]
      %v457 = vld [vmem:[%s2 + $0x88] sm:$0xf]
      %v458 = vld [vmem:[%s2 + $0x8c] sm:$0xf]
      %v459 = vld [vmem:[%s2 + $0x90] sm:$0xf]
      %v460 = vld [vmem:[%s2 + $0x94] sm:$0xf]
      %v461 = vld [vmem:[%s2 + $0x98] sm:$0xf]
      %v462 = vld [vmem:[%s2 + $0x9c] sm:$0xf]
      %v463 = vld [vmem:[%s2 + $0xa0] sm:$0xf]
      %v464 = vld [vmem:[%s2 + $0xa4] sm:$0xf]
      %v465 = vld [vmem:[%s2 + $0xa8] sm:$0xf]
      %v466 = vld [vmem:[%s2 + $0xac] sm:$0xf]
      %v467 = vld [vmem:[%s2 + $0xb0] sm:$0xf]
      %v468 = vld [vmem:[%s2 + $0xb4] sm:$0xf]
      %v469 = vld [vmem:[%s2 + $0xb8] sm:$0xf]
      %v470 = vld [vmem:[%s2 + $0xbc] sm:$0xf]
      %v471 = vld [vmem:[%s2 + $0xc0] sm:$0xf]
      %v472 = vld [vmem:[%s2 + $0xc4] sm:$0xf]
      %v473 = vld [vmem:[%s2 + $0xc8] sm:$0xf]
      %v474 = vld [vmem:[%s2 + $0xcc] sm:$0xf]
      %v475 = vld [vmem:[%s2 + $0xd0] sm:$0xf]
      %v476 = vld [vmem:[%s2 + $0xd4] sm:$0xf]
      %v477 = vld [vmem:[%s2 + $0xd8] sm:$0xf]
      %v478 = vld [vmem:[%s2 + $0xdc] sm:$0xf]
      %v479 = vld [vmem:[%s2 + $0xe0] sm:$0xf]
      %v480 = vld [vmem:[%s2 + $0xe4] sm:$0xf]
      %v481 = vld [vmem:[%s2 + $0xe8] sm:$0xf]
      %v482 = vld [vmem:[%s2 + $0xec] sm:$0xf]
      %v483 = vld [vmem:[%s2 + $0xf0] sm:$0xf]
      %v484 = vld [vmem:[%s2 + $0xf4] sm:$0xf]
      %v485 = vld [vmem:[%s2 + $0xf8] sm:$0xf]
      %v486 = vld [vmem:[%s2 + $0xfc] sm:$0xf]
      %v487 = vld [vmem:[%s3] sm:$0x1]
      %v489 = vlaneseq
      %v490 = vshrl.u32 %v489, 7
      %v491 = vsub.s32 0, %v490
      %v492 = vrot.slane %v487, %v491
      %v496 = vunpack.c.l.b16 %v421
      %v497 = vunpack.c.h.b16 %v421
      %v498 = vunpack.c.l.b16 %v422
      %v499 = vunpack.c.h.b16 %v422
      %v500 = vpack.c.b16 %v496, %v496
      %v501 = vpack.c.b16 %v497, %v497
      %v502 = vpack.c.b16 %v498, %v498
      %v503 = vpack.c.b16 %v499, %v499
      %v572 = vunpack.c.l.b16 %v423
      %v573 = vunpack.c.l.b16 %v424
      %v574 = vunpack.c.l.b16 %v425
      %v575 = vunpack.c.l.b16 %v426
      %v576 = vunpack.c.l.b16 %v427
      %v577 = vunpack.c.l.b16 %v428
      %v578 = vunpack.c.l.b16 %v429
      %v579 = vunpack.c.l.b16 %v430
      %v580 = vunpack.c.l.b16 %v431
      %v581 = vunpack.c.l.b16 %v432
      %v582 = vunpack.c.l.b16 %v433
      %v583 = vunpack.c.l.b16 %v434
      %v584 = vunpack.c.l.b16 %v435
      %v585 = vunpack.c.l.b16 %v436
      %v586 = vunpack.c.l.b16 %v437
      %v587 = vunpack.c.l.b16 %v438
      %v588 = vunpack.c.l.b16 %v439
      %v589 = vunpack.c.l.b16 %v440
      %v590 = vunpack.c.l.b16 %v441
      %v591 = vunpack.c.l.b16 %v442
      %v592 = vunpack.c.l.b16 %v443
      %v593 = vunpack.c.l.b16 %v444
      %v594 = vunpack.c.l.b16 %v445
      %v595 = vunpack.c.l.b16 %v446
      %v596 = vunpack.c.l.b16 %v447
      %v597 = vunpack.c.l.b16 %v448
      %v598 = vunpack.c.l.b16 %v449
      %v599 = vunpack.c.l.b16 %v450
      %v600 = vunpack.c.l.b16 %v451
      %v601 = vunpack.c.l.b16 %v452
      %v602 = vunpack.c.l.b16 %v453
      %v603 = vunpack.c.l.b16 %v454
      %v604 = vunpack.c.l.b16 %v455
      %v605 = vunpack.c.l.b16 %v456
      %v606 = vunpack.c.l.b16 %v457
      %v607 = vunpack.c.l.b16 %v458
      %v608 = vunpack.c.l.b16 %v459
      %v609 = vunpack.c.l.b16 %v460
      %v610 = vunpack.c.l.b16 %v461
      %v611 = vunpack.c.l.b16 %v462
      %v612 = vunpack.c.l.b16 %v463
      %v613 = vunpack.c.l.b16 %v464
      %v614 = vunpack.c.l.b16 %v465
      %v615 = vunpack.c.l.b16 %v466
      %v616 = vunpack.c.l.b16 %v467
      %v617 = vunpack.c.l.b16 %v468
      %v618 = vunpack.c.l.b16 %v469
      %v619 = vunpack.c.l.b16 %v470
      %v620 = vunpack.c.l.b16 %v471
      %v621 = vunpack.c.l.b16 %v472
      %v622 = vunpack.c.l.b16 %v473
      %v623 = vunpack.c.l.b16 %v474
      %v624 = vunpack.c.l.b16 %v475
      %v625 = vunpack.c.l.b16 %v476
      %v626 = vunpack.c.l.b16 %v477
      %v627 = vunpack.c.l.b16 %v478
      %v628 = vunpack.c.l.b16 %v479
      %v629 = vunpack.c.l.b16 %v480
      %v630 = vunpack.c.l.b16 %v481
      %v631 = vunpack.c.l.b16 %v482
      %v632 = vunpack.c.l.b16 %v483
      %v633 = vunpack.c.l.b16 %v484
      %v634 = vunpack.c.l.b16 %v485
      %v635 = vunpack.c.l.b16 %v486
      %v636 = vpack.c.b16 %v573, %v572
      %v637 = vpack.c.b16 %v575, %v574
      %v638 = vpack.c.b16 %v577, %v576
      %v639 = vpack.c.b16 %v579, %v578
      %v640 = vpack.c.b16 %v581, %v580
      %v641 = vpack.c.b16 %v583, %v582
      %v642 = vpack.c.b16 %v585, %v584
      %v643 = vpack.c.b16 %v587, %v586
      %v644 = vpack.c.b16 %v589, %v588
      %v645 = vpack.c.b16 %v591, %v590
      %v646 = vpack.c.b16 %v593, %v592
      %v647 = vpack.c.b16 %v595, %v594
      %v648 = vpack.c.b16 %v597, %v596
      %v649 = vpack.c.b16 %v599, %v598
      %v650 = vpack.c.b16 %v601, %v600
      %v651 = vpack.c.b16 %v603, %v602
      %v652 = vpack.c.b16 %v605, %v604
      %v653 = vpack.c.b16 %v607, %v606
      %v654 = vpack.c.b16 %v609, %v608
      %v655 = vpack.c.b16 %v611, %v610
      %v656 = vpack.c.b16 %v613, %v612
      %v657 = vpack.c.b16 %v615, %v614
      %v658 = vpack.c.b16 %v617, %v616
      %v659 = vpack.c.b16 %v619, %v618
      %v660 = vpack.c.b16 %v621, %v620
      %v661 = vpack.c.b16 %v623, %v622
      %v662 = vpack.c.b16 %v625, %v624
      %v663 = vpack.c.b16 %v627, %v626
      %v664 = vpack.c.b16 %v629, %v628
      %v665 = vpack.c.b16 %v631, %v630
      %v666 = vpack.c.b16 %v633, %v632
      %v667 = vpack.c.b16 %v635, %v634
      %700 = vmatprep.subr.bf16.mxu0 0
      %701 = vmatpush1.bf16.msra.mxu0 %v636
      %702 = vmatprep.subr.bf16.mxu0 0
      %703 = vmatpush1.bf16.msra.mxu0 %v637
      %704 = vmatprep.subr.bf16.mxu0 0
      %705 = vmatpush1.bf16.msra.mxu0 %v638
      %706 = vmatprep.subr.bf16.mxu0 0
      %707 = vmatpush1.bf16.msra.mxu0 %v639
      %708 = vmatprep.subr.bf16.mxu0 0
      %709 = vmatpush1.bf16.msra.mxu0 %v640
      %710 = vmatprep.subr.bf16.mxu0 0
      %711 = vmatpush1.bf16.msra.mxu0 %v641
      %712 = vmatprep.subr.bf16.mxu0 0
      %713 = vmatpush1.bf16.msra.mxu0 %v642
      %714 = vmatprep.subr.bf16.mxu0 0
      %715 = vmatpush1.bf16.msra.mxu0 %v643
      %716 = vmatprep.subr.bf16.mxu0 0
      %717 = vmatpush1.bf16.msra.mxu0 %v644
      %718 = vmatprep.subr.bf16.mxu0 0
      %719 = vmatpush1.bf16.msra.mxu0 %v645
      %720 = vmatprep.subr.bf16.mxu0 0
      %721 = vmatpush1.bf16.msra.mxu0 %v646
      %722 = vmatprep.subr.bf16.mxu0 0
      %723 = vmatpush1.bf16.msra.mxu0 %v647
      %724 = vmatprep.subr.bf16.mxu0 0
      %725 = vmatpush1.bf16.msra.mxu0 %v648
      %726 = vmatprep.subr.bf16.mxu0 0
      %727 = vmatpush1.bf16.msra.mxu0 %v649
      %728 = vmatprep.subr.bf16.mxu0 0
      %729 = vmatpush1.bf16.msra.mxu0 %v650
      %730 = vmatprep.subr.bf16.mxu0 0
      %731 = vmatpush1.bf16.msra.mxu0 %v651
      %732 = vmatprep.mubr.bf16.mxu0 %v501
      %733 = vmatmul.mubr.bf16.gmra.mrb[0].mxu0 %v500
      %v734 = vpop.f32.mrb[0].mxu0
      %v735 = vadd.f32 %v492, %v734
      %v736 = vpop.f32.mrb[0].mxu0
      %v737 = vpop.f32.mrb[0].mxu0
      %v738 = vpop.f32.mrb[0].mxu0
      %739 = vdwg.mxu0
      %740 = vmatprep.subr.bf16.mxu0 0
      %741 = vmatpush1.bf16.msra.mxu0 %v652
      %742 = vmatprep.subr.bf16.mxu0 0
      %743 = vmatpush1.bf16.msra.mxu0 %v653
      %744 = vmatprep.subr.bf16.mxu0 0
      %745 = vmatpush1.bf16.msra.mxu0 %v654
      %746 = vmatprep.subr.bf16.mxu0 0
      %747 = vmatpush1.bf16.msra.mxu0 %v655
      %748 = vmatprep.subr.bf16.mxu0 0
      %749 = vmatpush1.bf16.msra.mxu0 %v656
      %750 = vmatprep.subr.bf16.mxu0 0
      %751 = vmatpush1.bf16.msra.mxu0 %v657
      %752 = vmatprep.subr.bf16.mxu0 0
      %753 = vmatpush1.bf16.msra.mxu0 %v658
      %754 = vmatprep.subr.bf16.mxu0 0
      %755 = vmatpush1.bf16.msra.mxu0 %v659
      %756 = vmatprep.subr.bf16.mxu0 0
      %757 = vmatpush1.bf16.msra.mxu0 %v660
      %758 = vmatprep.subr.bf16.mxu0 0
      %759 = vmatpush1.bf16.msra.mxu0 %v661
      %760 = vmatprep.subr.bf16.mxu0 0
      %761 = vmatpush1.bf16.msra.mxu0 %v662
      %762 = vmatprep.subr.bf16.mxu0 0
      %763 = vmatpush1.bf16.msra.mxu0 %v663
      %764 = vmatprep.subr.bf16.mxu0 0
      %765 = vmatpush1.bf16.msra.mxu0 %v664
      %766 = vmatprep.subr.bf16.mxu0 0
      %767 = vmatpush1.bf16.msra.mxu0 %v665
      %768 = vmatprep.subr.bf16.mxu0 0
      %769 = vmatpush1.bf16.msra.mxu0 %v666
      %770 = vmatprep.subr.bf16.mxu0 0
      %771 = vmatpush1.bf16.msra.mxu0 %v667
      %772 = vmatprep.mubr.bf16.mxu0 %v503
      %773 = vmatmul.mubr.bf16.gmra.mrb[0].mxu0 %v502
      %v774 = vpop.f32.mrb[0].mxu0
      %v775 = vadd.f32 %v735, %v774
      %v776 = vpop.f32.mrb[0].mxu0
      %v777 = vpop.f32.mrb[0].mxu0
      %v778 = vpop.f32.mrb[0].mxu0
      %779 = vdwg.mxu0
      %v780 = vld [vmem:[%s4] sm:$0xf]
      %v781 = vld [vmem:[%s4 + $0x4] sm:$0xf]
      %v782 = vld [vmem:[%s4 + $0x8] sm:$0xf]
      %v783 = vld [vmem:[%s4 + $0xc] sm:$0xf]
      %v784 = vld [vmem:[%s5] sm:$0x1]
      %v786 = vlaneseq
      %v787 = vshrl.u32 %v786, 7
      %v788 = vsub.s32 0, %v787
      %v789 = vrot.slane %v784, %v788
      %v795 = vunpack.c.l.b16 %v780
      %v796 = vunpack.c.l.b16 %v781
      %v797 = vunpack.c.l.b16 %v782
      %v798 = vunpack.c.l.b16 %v783
      %v799 = vpack.c.b16 %v796, %v795
      %v800 = vpack.c.b16 %v798, %v797
      %vm803 = vcmask 261120
      %v805 = vsel %vm803, %v417, 0
      %v808 = vsel %vm803, %v418, 0
      %v811 = vsel %vm803, %v419, 0
      %v814 = vsel %vm803, %v420, 0
      %816 = vmatprep.subr.bf16.mxu0 0
      %817 = vmatpush1.bf16.msra.mxu0 %v799
      %818 = vmatprep.subr.bf16.mxu0 0
      %819 = vmatpush1.bf16.msra.mxu0 %v800
      %820 = vmatprep.subr.bf16.mxu0 0
      %821 = vmatpush1.bf16.msra.mxu0 0
      %822 = vmatprep.subr.bf16.mxu0 0
      %823 = vmatpush1.bf16.msra.mxu0 0
      %824 = vmatprep.subr.bf16.mxu0 0
      %825 = vmatpush1.bf16.msra.mxu0 0
      %826 = vmatprep.subr.bf16.mxu0 0
      %827 = vmatpush1.bf16.msra.mxu0 0
      %828 = vmatprep.subr.bf16.mxu0 0
      %829 = vmatpush1.bf16.msra.mxu0 0
      %830 = vmatprep.subr.bf16.mxu0 0
      %831 = vmatpush1.bf16.msra.mxu0 0
      %832 = vmatprep.subr.bf16.mxu0 0
      %833 = vmatpush1.bf16.msra.mxu0 0
      %834 = vmatprep.subr.bf16.mxu0 0
      %835 = vmatpush1.bf16.msra.mxu0 0
      %836 = vmatprep.subr.bf16.mxu0 0
      %837 = vmatpush1.bf16.msra.mxu0 0
      %838 = vmatprep.subr.bf16.mxu0 0
      %839 = vmatpush1.bf16.msra.mxu0 0
      %840 = vmatprep.subr.bf16.mxu0 0
      %841 = vmatpush1.bf16.msra.mxu0 0
      %842 = vmatprep.subr.bf16.mxu0 0
      %843 = vmatpush1.bf16.msra.mxu0 0
      %844 = vmatprep.subr.bf16.mxu0 0
      %845 = vmatpush1.bf16.msra.mxu0 0
      %846 = vmatprep.subr.bf16.mxu0 0
      %847 = vmatpush1.bf16.msra.mxu0 0
      %848 = vmatprep.mubr.bf16.mxu0 0
      %849 = vmatmul.mubr.bf16.gmra.mrb[0].mxu0 %v805
      %v850 = vpop.f32.mrb[0].mxu0
      %v851 = vadd.f32 %v789, %v850
      %v852 = vpop.f32.mrb[0].mxu0
      %v853 = vpop.f32.mrb[0].mxu0
      %v854 = vadd.f32 %v789, %v853
      %v855 = vpop.f32.mrb[0].mxu0
      %856 = vmatprep.mubr.bf16.mxu0 0
      %857 = vmatmul.mubr.bf16.gmra.mrb[0].mxu0 %v808
      %v858 = vpop.f32.mrb[0].mxu0
      %v859 = vadd.f32 %v789, %v858
      %v860 = vpop.f32.mrb[0].mxu0
      %v861 = vpop.f32.mrb[0].mxu0
      %v862 = vadd.f32 %v789, %v861
      %v863 = vpop.f32.mrb[0].mxu0
      %864 = vmatprep.mubr.bf16.mxu0 0
      %865 = vmatmul.mubr.bf16.gmra.mrb[0].mxu0 %v811
      %v866 = vpop.f32.mrb[0].mxu0
      %v867 = vadd.f32 %v789, %v866
      %v868 = vpop.f32.mrb[0].mxu0
      %v869 = vpop.f32.mrb[0].mxu0
      %v870 = vadd.f32 %v789, %v869
      %v871 = vpop.f32.mrb[0].mxu0
      %872 = vmatprep.mubr.bf16.mxu0 0
      %873 = vmatmul.mubr.bf16.gmra.mrb[0].mxu0 %v814
      %v874 = vpop.f32.mrb[0].mxu0
      %v875 = vadd.f32 %v789, %v874
      %v876 = vpop.f32.mrb[0].mxu0
      %v877 = vpop.f32.mrb[0].mxu0
      %v878 = vadd.f32 %v789, %v877
      %v879 = vpop.f32.mrb[0].mxu0
      %880 = vdwg.mxu0
      %v881 = vpack.c.bf16 %v854, %v851
      %v882 = vpack.c.bf16 %v862, %v859
      %v883 = vpack.c.bf16 %v870, %v867
      %v884 = vpack.c.bf16 %v878, %v875
      %v885 = vpack.c.bf16 %v775, %v775
      %887 = vrot.lane.b32.xlu0 %v885, 96
      %v888 = vpop.permute.xlu0 %887
      %vm889 = vcmask 64512
      %v891 = vsel %vm889, %v881, 0
      %v894 = vsel %vm889, %v882, 0
      %v897 = vsel %vm889, %v883, 0
      %v900 = vsel %vm889, %v884, 0
      %v903 = vsel %vm889, %v888, 0
      %905 = vmatprep.subr.bf16.mxu0 0
      %906 = vmatpush1.bf16.xpose.msra.mxu0 %v903
      %907 = vmatprep.subr.bf16.mxu0 0
      %908 = vmatpush1.bf16.xpose.msra.mxu0 0
      %909 = vmatprep.subr.bf16.mxu0 0
      %910 = vmatpush1.bf16.xpose.msra.mxu0 0
      %911 = vmatprep.subr.bf16.mxu0 0
      %912 = vmatpush1.bf16.xpose.msra.mxu0 0
      %913 = vmatprep.subr.bf16.mxu0 0
      %914 = vmatpush1.bf16.xpose.msra.mxu0 0
      %915 = vmatprep.subr.bf16.mxu0 0
      %916 = vmatpush1.bf16.xpose.msra.mxu0 0
      %917 = vmatprep.subr.bf16.mxu0 0
      %918 = vmatpush1.bf16.xpose.msra.mxu0 0
      %919 = vmatprep.subr.bf16.mxu0 0
      %920 = vmatpush1.bf16.xpose.msra.mxu0 0
      %921 = vmatprep.subr.bf16.mxu0 0
      %922 = vmatpush1.bf16.xpose.msra.mxu0 0
      %923 = vmatprep.subr.bf16.mxu0 0
      %924 = vmatpush1.bf16.xpose.msra.mxu0 0
      %925 = vmatprep.subr.bf16.mxu0 0
      %926 = vmatpush1.bf16.xpose.msra.mxu0 0
      %927 = vmatprep.subr.bf16.mxu0 0
      %928 = vmatpush1.bf16.xpose.msra.mxu0 0
      %929 = vmatprep.subr.bf16.mxu0 0
      %930 = vmatpush1.bf16.xpose.msra.mxu0 0
      %931 = vmatprep.subr.bf16.mxu0 0
      %932 = vmatpush1.bf16.xpose.msra.mxu0 0
      %933 = vmatprep.subr.bf16.mxu0 0
      %934 = vmatpush1.bf16.xpose.msra.mxu0 0
      %935 = vmatprep.subr.bf16.mxu0 0
      %936 = vmatpush1.bf16.xpose.msra.mxu0 0
      %937 = vmatprep.mubr.bf16.mxu0 0
      %938 = vmatmul.mubr.bf16.gmra.mrb[0].mxu0 %v891
      %v939 = vpop.f32.mrb[0].mxu0
      %v940 = vadd.f32 0.0, %v939
      %v941 = vpop.f32.mrb[0].mxu0
      %v942 = vpop.f32.mrb[0].mxu0
      %v943 = vadd.f32 0.0, %v942
      %v944 = vpop.f32.mrb[0].mxu0
      %945 = vmatprep.mubr.bf16.mxu0 0
      %946 = vmatmul.mubr.bf16.gmra.mrb[0].mxu0 %v894
      %v947 = vpop.f32.mrb[0].mxu0
      %v948 = vadd.f32 0.0, %v947
      %v949 = vpop.f32.mrb[0].mxu0
      %v950 = vpop.f32.mrb[0].mxu0
      %v951 = vadd.f32 0.0, %v950
      %v952 = vpop.f32.mrb[0].mxu0
      %953 = vmatprep.mubr.bf16.mxu0 0
      %954 = vmatmul.mubr.bf16.gmra.mrb[0].mxu0 %v897
      %v955 = vpop.f32.mrb[0].mxu0
      %v956 = vadd.f32 0.0, %v955
      %v957 = vpop.f32.mrb[0].mxu0
      %v958 = vpop.f32.mrb[0].mxu0
      %v959 = vadd.f32 0.0, %v958
      %v960 = vpop.f32.mrb[0].mxu0
      %961 = vmatprep.mubr.bf16.mxu0 0
      %962 = vmatmul.mubr.bf16.gmra.mrb[0].mxu0 %v900
      %v963 = vpop.f32.mrb[0].mxu0
      %v964 = vadd.f32 0.0, %v963
      %v965 = vpop.f32.mrb[0].mxu0
      %v966 = vpop.f32.mrb[0].mxu0
      %v967 = vadd.f32 0.0, %v966
      %v968 = vpop.f32.mrb[0].mxu0
      %969 = vdwg.mxu0
      %v970 = vmul.f32 %v940, 0.35355338
      %v971 = vmul.f32 %v943, 0.35355338
      %v972 = vmul.f32 %v948, 0.35355338
      %v973 = vmul.f32 %v951, 0.35355338
      %v974 = vmul.f32 %v956, 0.35355338
      %v975 = vmul.f32 %v959, 0.35355338
      %v976 = vmul.f32 %v964, 0.35355338
      %v977 = vmul.f32 %v967, 0.35355338
      %v978 = vsel %vm889, %v970, -inf
      %979 = vmax.xlane.f32.xlu0 %v978
      %v980 = vpop.xlane.xlu0 %979
      %v981 = vsel %vm889, %v971, -inf
      %982 = vmax.xlane.f32.xlu0 %v981
      %v983 = vpop.xlane.xlu0 %982
      %v984 = vsel %vm889, %v972, -inf
      %985 = vmax.xlane.f32.xlu0 %v984
      %v986 = vpop.xlane.xlu0 %985
      %v987 = vsel %vm889, %v973, -inf
      %988 = vmax.xlane.f32.xlu0 %v987
      %v989 = vpop.xlane.xlu0 %988
      %v990 = vsel %vm889, %v974, -inf
      %991 = vmax.xlane.f32.xlu0 %v990
      %v992 = vpop.xlane.xlu0 %991
      %v993 = vsel %vm889, %v975, -inf
      %994 = vmax.xlane.f32.xlu0 %v993
      %v995 = vpop.xlane.xlu0 %994
      %v996 = vsel %vm889, %v976, -inf
      %997 = vmax.xlane.f32.xlu0 %v996
      %v998 = vpop.xlane.xlu0 %997
      %v999 = vsel %vm889, %v977, -inf
      %1000 = vmax.xlane.f32.xlu0 %v999
      %v1001 = vpop.xlane.xlu0 %1000
      %v1002 = vsub.f32 %v970, %v980
      %v1003 = vsub.f32 %v971, %v983
      %v1004 = vsub.f32 %v972, %v986
      %v1005 = vsub.f32 %v973, %v989
      %v1006 = vsub.f32 %v974, %v992
      %v1007 = vsub.f32 %v975, %v995
      %v1008 = vsub.f32 %v976, %v998
      %v1009 = vsub.f32 %v977, %v1001
      %v1010 = vmul.f32 %v1002, 1.442695
      %v1011 = vpow.pop %v1010
      %v1012 = vmul.f32 %v1003, 1.442695
      %v1013 = vpow.pop %v1012
      %v1014 = vmul.f32 %v1004, 1.442695
      %v1015 = vpow.pop %v1014
      %v1016 = vmul.f32 %v1005, 1.442695
      %v1017 = vpow.pop %v1016
      %v1018 = vmul.f32 %v1006, 1.442695
      %v1019 = vpow.pop %v1018
      %v1020 = vmul.f32 %v1007, 1.442695
      %v1021 = vpow.pop %v1020
      %v1022 = vmul.f32 %v1008, 1.442695
      %v1023 = vpow.pop %v1022
      %v1024 = vmul.f32 %v1009, 1.442695
      %v1025 = vpow.pop %v1024
      %v1026 = vsel %vm889, %v1011, 0.0
      %1027 = vadd.xlane.f32.xlu0 %v1026
      %v1028 = vpop.xlane.xlu0 %1027
      %v1029 = vsel %vm889, %v1013, 0.0
      %1030 = vadd.xlane.f32.xlu0 %v1029
      %v1031 = vpop.xlane.xlu0 %1030
      %v1032 = vsel %vm889, %v1015, 0.0
      %1033 = vadd.xlane.f32.xlu0 %v1032
      %v1034 = vpop.xlane.xlu0 %1033
      %v1035 = vsel %vm889, %v1017, 0.0
      %1036 = vadd.xlane.f32.xlu0 %v1035
      %v1037 = vpop.xlane.xlu0 %1036
      %v1038 = vsel %vm889, %v1019, 0.0
      %1039 = vadd.xlane.f32.xlu0 %v1038
      %v1040 = vpop.xlane.xlu0 %1039
      %v1041 = vsel %vm889, %v1021, 0.0
      %1042 = vadd.xlane.f32.xlu0 %v1041
      %v1043 = vpop.xlane.xlu0 %1042
      %v1044 = vsel %vm889, %v1023, 0.0
      %1045 = vadd.xlane.f32.xlu0 %v1044
      %v1046 = vpop.xlane.xlu0 %1045
      %v1047 = vsel %vm889, %v1025, 0.0
      %1048 = vadd.xlane.f32.xlu0 %v1047
      %v1049 = vpop.xlane.xlu0 %1048
      %v1050 = vrcp.pop %v1028
      %v1051 = vrcp.pop %v1031
      %v1052 = vrcp.pop %v1034
      %v1053 = vrcp.pop %v1037
      %v1054 = vrcp.pop %v1040
      %v1055 = vrcp.pop %v1043
      %v1056 = vrcp.pop %v1046
      %v1057 = vrcp.pop %v1049
      %v1058 = vmul.f32 %v1011, %v1050
      %v1059 = vmul.f32 %v1013, %v1051
      %v1060 = vmul.f32 %v1015, %v1052
      %v1061 = vmul.f32 %v1017, %v1053
      %v1062 = vmul.f32 %v1019, %v1054
      %v1063 = vmul.f32 %v1021, %v1055
      %v1064 = vmul.f32 %v1023, %v1056
      %v1065 = vmul.f32 %v1025, %v1057
      %v1066 = vpack.c.bf16 %v1059, %v1058
      %v1067 = vpack.c.bf16 %v1061, %v1060
      %v1068 = vpack.c.bf16 %v1063, %v1062
      %v1069 = vpack.c.bf16 %v1065, %v1064
      %v1071 = vsel %vm889, %v1066, 0
      %v1074 = vsel %vm889, %v1067, 0
      %v1077 = vsel %vm889, %v1068, 0
      %v1080 = vsel %vm889, %v1069, 0
      %vm1082 = vcmask 1043456
      %v1084 = vsel %vm1082, %v885, 0
      %1086 = vmatprep.subr.bf16.mxu0 0
      %1087 = vmatpush1.bf16.msra.mxu0 %v1084
      %1088 = vmatprep.subr.bf16.mxu0 0
      %1089 = vmatpush1.bf16.msra.mxu0 0
      %1090 = vmatprep.subr.bf16.mxu0 0
      %1091 = vmatpush1.bf16.msra.mxu0 0
      %1092 = vmatprep.subr.bf16.mxu0 0
      %1093 = vmatpush1.bf16.msra.mxu0 0
      %1094 = vmatprep.subr.bf16.mxu0 0
      %1095 = vmatpush1.bf16.msra.mxu0 0
      %1096 = vmatprep.subr.bf16.mxu0 0
      %1097 = vmatpush1.bf16.msra.mxu0 0
      %1098 = vmatprep.subr.bf16.mxu0 0
      %1099 = vmatpush1.bf16.msra.mxu0 0
      %1100 = vmatprep.subr.bf16.mxu0 0
      %1101 = vmatpush1.bf16.msra.mxu0 0
      %1102 = vmatprep.subr.bf16.mxu0 0
      %1103 = vmatpush1.bf16.msra.mxu0 0
      %1104 = vmatprep.subr.bf16.mxu0 0
      %1105 = vmatpush1.bf16.msra.mxu0 0
      %1106 = vmatprep.subr.bf16.mxu0 0
      %1107 = vmatpush1.bf16.msra.mxu0 0
      %1108 = vmatprep.subr.bf16.mxu0 0
      %1109 = vmatpush1.bf16.msra.mxu0 0
      %1110 = vmatprep.subr.bf16.mxu0 0
      %1111 = vmatpush1.bf16.msra.mxu0 0
      %1112 = vmatprep.subr.bf16.mxu0 0
      %1113 = vmatpush1.bf16.msra.mxu0 0
      %1114 = vmatprep.subr.bf16.mxu0 0
      %1115 = vmatpush1.bf16.msra.mxu0 0
      %1116 = vmatprep.subr.bf16.mxu0 0
      %1117 = vmatpush1.bf16.msra.mxu0 0
      %1118 = vmatprep.mubr.bf16.mxu0 0
      %1119 = vmatmul.mubr.bf16.gmra.mrb[0].mxu0 %v1071
      %v1120 = vpop.f32.mrb[0].mxu0
      %v1121 = vadd.f32 %v401, %v1120
      %v1122 = vpop.f32.mrb[0].mxu0
      %v1123 = vpop.f32.mrb[0].mxu0
      %v1124 = vadd.f32 %v402, %v1123
      %v1125 = vpop.f32.mrb[0].mxu0
      %1126 = vmatprep.mubr.bf16.mxu0 0
      %1127 = vmatmul.mubr.bf16.gmra.mrb[0].mxu0 %v1074
      %v1128 = vpop.f32.mrb[0].mxu0
      %v1129 = vadd.f32 %v403, %v1128
      %v1130 = vpop.f32.mrb[0].mxu0
      %v1131 = vpop.f32.mrb[0].mxu0
      %v1132 = vadd.f32 %v404, %v1131
      %v1133 = vpop.f32.mrb[0].mxu0
      %1134 = vmatprep.mubr.bf16.mxu0 0
      %1135 = vmatmul.mubr.bf16.gmra.mrb[0].mxu0 %v1077
      %v1136 = vpop.f32.mrb[0].mxu0
      %v1137 = vadd.f32 %v405, %v1136
      %v1138 = vpop.f32.mrb[0].mxu0
      %v1139 = vpop.f32.mrb[0].mxu0
      %v1140 = vadd.f32 %v406, %v1139
      %v1141 = vpop.f32.mrb[0].mxu0
      %1142 = vmatprep.mubr.bf16.mxu0 0
      %1143 = vmatmul.mubr.bf16.gmra.mrb[0].mxu0 %v1080
      %v1144 = vpop.f32.mrb[0].mxu0
      %v1145 = vadd.f32 %v407, %v1144
      %v1146 = vpop.f32.mrb[0].mxu0
      %v1147 = vpop.f32.mrb[0].mxu0
      %v1148 = vadd.f32 %v408, %v1147
      %v1149 = vpop.f32.mrb[0].mxu0
      %1150 = vdwg.mxu0
      %v1151 = vsel %vm803, %v1121, 0.0
      %1152 = vadd.xlane.f32.xlu0 %v1151
      %v1153 = vpop.xlane.xlu0 %1152
      %v1154 = vsel %vm803, %v1124, 0.0
      %1155 = vadd.xlane.f32.xlu0 %v1154
      %v1156 = vpop.xlane.xlu0 %1155
      %v1157 = vsel %vm803, %v1129, 0.0
      %1158 = vadd.xlane.f32.xlu0 %v1157
      %v1159 = vpop.xlane.xlu0 %1158
      %v1160 = vsel %vm803, %v1132, 0.0
      %1161 = vadd.xlane.f32.xlu0 %v1160
      %v1162 = vpop.xlane.xlu0 %1161
      %v1163 = vsel %vm803, %v1137, 0.0
      %1164 = vadd.xlane.f32.xlu0 %v1163
      %v1165 = vpop.xlane.xlu0 %1164
      %v1166 = vsel %vm803, %v1140, 0.0
      %1167 = vadd.xlane.f32.xlu0 %v1166
      %v1168 = vpop.xlane.xlu0 %1167
      %v1169 = vsel %vm803, %v1145, 0.0
      %1170 = vadd.xlane.f32.xlu0 %v1169
      %v1171 = vpop.xlane.xlu0 %1170
      %v1172 = vsel %vm803, %v1148, 0.0
      %1173 = vadd.xlane.f32.xlu0 %v1172
      %v1174 = vpop.xlane.xlu0 %1173
      %v1175 = vrcp.pop 32.0
      %v1176 = vmul.f32 %v1153, %v1175
      %v1177 = vmul.f32 %v1156, %v1175
      %v1178 = vmul.f32 %v1159, %v1175
      %v1179 = vmul.f32 %v1162, %v1175
      %v1180 = vmul.f32 %v1165, %v1175
      %v1181 = vmul.f32 %v1168, %v1175
      %v1182 = vmul.f32 %v1171, %v1175
      %v1183 = vmul.f32 %v1174, %v1175
      %v1184 = vsub.f32 %v1121, %v1176
      %v1185 = vsub.f32 %v1124, %v1177
      %v1186 = vsub.f32 %v1129, %v1178
      %v1187 = vsub.f32 %v1132, %v1179
      %v1188 = vsub.f32 %v1137, %v1180
      %v1189 = vsub.f32 %v1140, %v1181
      %v1190 = vsub.f32 %v1145, %v1182
      %v1191 = vsub.f32 %v1148, %v1183
      %v1192 = vmul.f32 %v1184, %v1184
      %v1193 = vmul.f32 %v1185, %v1185
      %v1194 = vmul.f32 %v1186, %v1186
      %v1195 = vmul.f32 %v1187, %v1187
      %v1196 = vmul.f32 %v1188, %v1188
      %v1197 = vmul.f32 %v1189, %v1189
      %v1198 = vmul.f32 %v1190, %v1190
      %v1199 = vmul.f32 %v1191, %v1191
      %v1200 = vsel %vm803, %v1192, 0.0
      %1201 = vadd.xlane.f32.xlu0 %v1200
      %v1202 = vpop.xlane.xlu0 %1201
      %v1203 = vsel %vm803, %v1193, 0.0
      %1204 = vadd.xlane.f32.xlu0 %v1203
      %v1205 = vpop.xlane.xlu0 %1204
      %v1206 = vsel %vm803, %v1194, 0.0
      %1207 = vadd.xlane.f32.xlu0 %v1206
      %v1208 = vpop.xlane.xlu0 %1207
      %v1209 = vsel %vm803, %v1195, 0.0
      %1210 = vadd.xlane.f32.xlu0 %v1209
      %v1211 = vpop.xlane.xlu0 %1210
      %v1212 = vsel %vm803, %v1196, 0.0
      %1213 = vadd.xlane.f32.xlu0 %v1212
      %v1214 = vpop.xlane.xlu0 %1213
      %v1215 = vsel %vm803, %v1197, 0.0
      %1216 = vadd.xlane.f32.xlu0 %v1215
      %v1217 = vpop.xlane.xlu0 %1216
      %v1218 = vsel %vm803, %v1198, 0.0
      %1219 = vadd.xlane.f32.xlu0 %v1218
      %v1220 = vpop.xlane.xlu0 %1219
      %v1221 = vsel %vm803, %v1199, 0.0
      %1222 = vadd.xlane.f32.xlu0 %v1221
      %v1223 = vpop.xlane.xlu0 %1222
      %v1224 = vmul.f32 %v1202, %v1175
      %v1225 = vmul.f32 %v1205, %v1175
      %v1226 = vmul.f32 %v1208, %v1175
      %v1227 = vmul.f32 %v1211, %v1175
      %v1228 = vmul.f32 %v1214, %v1175
      %v1229 = vmul.f32 %v1217, %v1175
      %v1230 = vmul.f32 %v1220, %v1175
      %v1231 = vmul.f32 %v1223, %v1175
      %v1232 = vadd.f32 %v1224, 1e-05
      %v1233 = vadd.f32 %v1225, 1e-05
      %v1234 = vadd.f32 %v1226, 1e-05
      %v1235 = vadd.f32 %v1227, 1e-05
      %v1236 = vadd.f32 %v1228, 1e-05
      %v1237 = vadd.f32 %v1229, 1e-05
      %v1238 = vadd.f32 %v1230, 1e-05
      %v1239 = vadd.f32 %v1231, 1e-05
      %v1240 = vrsqrt.pop %v1232
      %v1241 = vrsqrt.pop %v1233
      %v1242 = vrsqrt.pop %v1234
      %v1243 = vrsqrt.pop %v1235
      %v1244 = vrsqrt.pop %v1236
      %v1245 = vrsqrt.pop %v1237
      %v1246 = vrsqrt.pop %v1238
      %v1247 = vrsqrt.pop %v1239
      %v1248 = vmul.f32 %v1184, %v1240
      %v1249 = vmul.f32 %v1185, %v1241
      %v1250 = vmul.f32 %v1186, %v1242
      %v1251 = vmul.f32 %v1187, %v1243
      %v1252 = vmul.f32 %v1188, %v1244
      %v1253 = vmul.f32 %v1189, %v1245
      %v1254 = vmul.f32 %v1190, %v1246
      %v1255 = vmul.f32 %v1191, %v1247
      %v1256 = vld [vmem:[%s6] sm:$0x1]
      %v1258 = vlaneseq
      %v1259 = vshrl.u32 %v1258, 7
      %v1260 = vsub.s32 0, %v1259
      %v1261 = vrot.slane %v1256, %v1260
      %v1263 = vmul.f32 %v1248, %v1261
      %v1264 = vmul.f32 %v1249, %v1261
      %v1265 = vmul.f32 %v1250, %v1261
      %v1266 = vmul.f32 %v1251, %v1261
      %v1267 = vmul.f32 %v1252, %v1261
      %v1268 = vmul.f32 %v1253, %v1261
      %v1269 = vmul.f32 %v1254, %v1261
      %v1270 = vmul.f32 %v1255, %v1261
      %v1271 = vld [vmem:[%s7] sm:$0x1]
      %v1273 = vlaneseq
      %v1274 = vshrl.u32 %v1273, 7
      %v1275 = vsub.s32 0, %v1274
      %v1276 = vrot.slane %v1271, %v1275
      %v1278 = vadd.f32 %v1263, %v1276
      %v1279 = vadd.f32 %v1264, %v1276
      %v1280 = vadd.f32 %v1265, %v1276
      %v1281 = vadd.f32 %v1266, %v1276
      %v1282 = vadd.f32 %v1267, %v1276
      %v1283 = vadd.f32 %v1268, %v1276
      %v1284 = vadd.f32 %v1269, %v1276
      %v1285 = vadd.f32 %v1270, %v1276
      %v1286 = vpack.c.bf16 %v1279, %v1278
      %v1287 = vpack.c.bf16 %v1281, %v1280
      %v1288 = vpack.c.bf16 %v1283, %v1282
      %v1289 = vpack.c.bf16 %v1285, %v1284
      %1294 = vrot.lane.b32.xlu0 %v881, 120
      %v1295 = vpop.permute.xlu0 %1294
      %1296 = vrot.lane.b32.xlu0 %v882, 120
      %v1297 = vpop.permute.xlu0 %1296
      %1298 = vrot.lane.b32.xlu0 %v883, 120
      %v1299 = vpop.permute.xlu0 %1298
      %1300 = vrot.lane.b32.xlu0 %v884, 120
      %v1301 = vpop.permute.xlu0 %1300
      %v1303 = vsel %vm803, %v1286, 0
      %v1306 = vsel %vm803, %v1287, 0
      %v1309 = vsel %vm803, %v1288, 0
      %v1312 = vsel %vm803, %v1289, 0
      %v1315 = vsel %vm803, %v1295, 0
      %v1318 = vsel %vm803, %v1297, 0
      %v1321 = vsel %vm803, %v1299, 0
      %v1324 = vsel %vm803, %v1301, 0
      %1326 = vmatprep.subr.bf16.mxu0 0
      %1327 = vmatpush1.bf16.xpose.msra.mxu0 %v1315
      %1328 = vmatprep.subr.bf16.mxu0 0
      %1329 = vmatpush1.bf16.xpose.msra.mxu0 %v1318
      %1330 = vmatprep.subr.bf16.mxu0 0
      %1331 = vmatpush1.bf16.xpose.msra.mxu0 %v1321
      %1332 = vmatprep.subr.bf16.mxu0 0
      %1333 = vmatpush1.bf16.xpose.msra.mxu0 %v1324
      %1334 = vmatprep.subr.bf16.mxu0 0
      %1335 = vmatpush1.bf16.xpose.msra.mxu0 0
      %1336 = vmatprep.subr.bf16.mxu0 0
      %1337 = vmatpush1.bf16.xpose.msra.mxu0 0
      %1338 = vmatprep.subr.bf16.mxu0 0
      %1339 = vmatpush1.bf16.xpose.msra.mxu0 0
      %1340 = vmatprep.subr.bf16.mxu0 0
      %1341 = vmatpush1.bf16.xpose.msra.mxu0 0
      %1342 = vmatprep.subr.bf16.mxu0 0
      %1343 = vmatpush1.bf16.xpose.msra.mxu0 0
      %1344 = vmatprep.subr.bf16.mxu0 0
      %1345 = vmatpush1.bf16.xpose.msra.mxu0 0
      %1346 = vmatprep.subr.bf16.mxu0 0
      %1347 = vmatpush1.bf16.xpose.msra.mxu0 0
      %1348 = vmatprep.subr.bf16.mxu0 0
      %1349 = vmatpush1.bf16.xpose.msra.mxu0 0
      %1350 = vmatprep.subr.bf16.mxu0 0
      %1351 = vmatpush1.bf16.xpose.msra.mxu0 0
      %1352 = vmatprep.subr.bf16.mxu0 0
      %1353 = vmatpush1.bf16.xpose.msra.mxu0 0
      %1354 = vmatprep.subr.bf16.mxu0 0
      %1355 = vmatpush1.bf16.xpose.msra.mxu0 0
      %1356 = vmatprep.subr.bf16.mxu0 0
      %1357 = vmatpush1.bf16.xpose.msra.mxu0 0
      %1358 = vmatprep.mubr.bf16.mxu0 0
      %1359 = vmatmul.mubr.bf16.gmra.mrb[0].mxu0 %v1303
      %v1360 = vpop.f32.mrb[0].mxu0
      %v1361 = vadd.f32 0.0, %v1360
      %v1362 = vpop.f32.mrb[0].mxu0
      %v1363 = vpop.f32.mrb[0].mxu0
      %v1364 = vadd.f32 0.0, %v1363
      %v1365 = vpop.f32.mrb[0].mxu0
      %1366 = vmatprep.mubr.bf16.mxu0 0
      %1367 = vmatmul.mubr.bf16.gmra.mrb[0].mxu0 %v1306
      %v1368 = vpop.f32.mrb[0].mxu0
      %v1369 = vadd.f32 0.0, %v1368
      %v1370 = vpop.f32.mrb[0].mxu0
      %v1371 = vpop.f32.mrb[0].mxu0
      %v1372 = vadd.f32 0.0, %v1371
      %v1373 = vpop.f32.mrb[0].mxu0
      %1374 = vmatprep.mubr.bf16.mxu0 0
      %1375 = vmatmul.mubr.bf16.gmra.mrb[0].mxu0 %v1309
      %v1376 = vpop.f32.mrb[0].mxu0
      %v1377 = vadd.f32 0.0, %v1376
      %v1378 = vpop.f32.mrb[0].mxu0
      %v1379 = vpop.f32.mrb[0].mxu0
      %v1380 = vadd.f32 0.0, %v1379
      %v1381 = vpop.f32.mrb[0].mxu0
      %1382 = vmatprep.mubr.bf16.mxu0 0
      %1383 = vmatmul.mubr.bf16.gmra.mrb[0].mxu0 %v1312
      %v1384 = vpop.f32.mrb[0].mxu0
      %v1385 = vadd.f32 0.0, %v1384
      %v1386 = vpop.f32.mrb[0].mxu0
      %v1387 = vpop.f32.mrb[0].mxu0
      %v1388 = vadd.f32 0.0, %v1387
      %v1389 = vpop.f32.mrb[0].mxu0
      %1390 = vdwg.mxu0
      %v1391 = vmul.f32 %v1361, 0.17677669
      %v1392 = vmul.f32 %v1364, 0.17677669
      %v1393 = vmul.f32 %v1369, 0.17677669
      %v1394 = vmul.f32 %v1372, 0.17677669
      %v1395 = vmul.f32 %v1377, 0.17677669
      %v1396 = vmul.f32 %v1380, 0.17677669
      %v1397 = vmul.f32 %v1385, 0.17677669
      %v1398 = vmul.f32 %v1388, 0.17677669
      %vm1399 = vcmask 523264
      %v1400 = vsel %vm1399, %v1391, -inf
      %1401 = vmax.xlane.f32.xlu0 %v1400
      %v1402 = vpop.xlane.xlu0 %1401
      %v1403 = vsel %vm1399, %v1392, -inf
      %1404 = vmax.xlane.f32.xlu0 %v1403
      %v1405 = vpop.xlane.xlu0 %1404
      %v1406 = vsel %vm1399, %v1393, -inf
      %1407 = vmax.xlane.f32.xlu0 %v1406
      %v1408 = vpop.xlane.xlu0 %1407
      %v1409 = vsel %vm1399, %v1394, -inf
      %1410 = vmax.xlane.f32.xlu0 %v1409
      %v1411 = vpop.xlane.xlu0 %1410
      %v1412 = vsel %vm1399, %v1395, -inf
      %1413 = vmax.xlane.f32.xlu0 %v1412
      %v1414 = vpop.xlane.xlu0 %1413
      %v1415 = vsel %vm1399, %v1396, -inf
      %1416 = vmax.xlane.f32.xlu0 %v1415
      %v1417 = vpop.xlane.xlu0 %1416
      %v1418 = vsel %vm1399, %v1397, -inf
      %1419 = vmax.xlane.f32.xlu0 %v1418
      %v1420 = vpop.xlane.xlu0 %1419
      %v1421 = vsel %vm1399, %v1398, -inf
      %1422 = vmax.xlane.f32.xlu0 %v1421
      %v1423 = vpop.xlane.xlu0 %1422
      %v1424 = vsub.f32 %v1391, %v1402
      %v1425 = vsub.f32 %v1392, %v1405
      %v1426 = vsub.f32 %v1393, %v1408
      %v1427 = vsub.f32 %v1394, %v1411
      %v1428 = vsub.f32 %v1395, %v1414
      %v1429 = vsub.f32 %v1396, %v1417
      %v1430 = vsub.f32 %v1397, %v1420
      %v1431 = vsub.f32 %v1398, %v1423
      %v1432 = vmul.f32 %v1424, 1.442695
      %v1433 = vpow.pop %v1432
      %v1434 = vmul.f32 %v1425, 1.442695
      %v1435 = vpow.pop %v1434
      %v1436 = vmul.f32 %v1426, 1.442695
      %v1437 = vpow.pop %v1436
      %v1438 = vmul.f32 %v1427, 1.442695
      %v1439 = vpow.pop %v1438
      %v1440 = vmul.f32 %v1428, 1.442695
      %v1441 = vpow.pop %v1440
      %v1442 = vmul.f32 %v1429, 1.442695
      %v1443 = vpow.pop %v1442
      %v1444 = vmul.f32 %v1430, 1.442695
      %v1445 = vpow.pop %v1444
      %v1446 = vmul.f32 %v1431, 1.442695
      %v1447 = vpow.pop %v1446
      %v1448 = vsel %vm1399, %v1433, 0.0
      %1449 = vadd.xlane.f32.xlu0 %v1448
      %v1450 = vpop.xlane.xlu0 %1449
      %v1451 = vsel %vm1399, %v1435, 0.0
      %1452 = vadd.xlane.f32.xlu0 %v1451
      %v1453 = vpop.xlane.xlu0 %1452
      %v1454 = vsel %vm1399, %v1437, 0.0
      %1455 = vadd.xlane.f32.xlu0 %v1454
      %v1456 = vpop.xlane.xlu0 %1455
      %v1457 = vsel %vm1399, %v1439, 0.0
      %1458 = vadd.xlane.f32.xlu0 %v1457
      %v1459 = vpop.xlane.xlu0 %1458
      %v1460 = vsel %vm1399, %v1441, 0.0
      %1461 = vadd.xlane.f32.xlu0 %v1460
      %v1462 = vpop.xlane.xlu0 %1461
      %v1463 = vsel %vm1399, %v1443, 0.0
      %1464 = vadd.xlane.f32.xlu0 %v1463
      %v1465 = vpop.xlane.xlu0 %1464
      %v1466 = vsel %vm1399, %v1445, 0.0
      %1467 = vadd.xlane.f32.xlu0 %v1466
      %v1468 = vpop.xlane.xlu0 %1467
      %v1469 = vsel %vm1399, %v1447, 0.0
      %1470 = vadd.xlane.f32.xlu0 %v1469
      %v1471 = vpop.xlane.xlu0 %1470
      %v1472 = vrcp.pop %v1450
      %v1473 = vrcp.pop %v1453
      %v1474 = vrcp.pop %v1456
      %v1475 = vrcp.pop %v1459
      %v1476 = vrcp.pop %v1462
      %v1477 = vrcp.pop %v1465
      %v1478 = vrcp.pop %v1468
      %v1479 = vrcp.pop %v1471
      %v1480 = vmul.f32 %v1433, %v1472
      %v1481 = vmul.f32 %v1435, %v1473
      %v1482 = vmul.f32 %v1437, %v1474
      %v1483 = vmul.f32 %v1439, %v1475
      %v1484 = vmul.f32 %v1441, %v1476
      %v1485 = vmul.f32 %v1443, %v1477
      %v1486 = vmul.f32 %v1445, %v1478
      %v1487 = vmul.f32 %v1447, %v1479
      %v1488 = vpack.c.bf16 %v1481, %v1480
      %v1489 = vpack.c.bf16 %v1483, %v1482
      %v1490 = vpack.c.bf16 %v1485, %v1484
      %v1491 = vpack.c.bf16 %v1487, %v1486
      %v1493 = vsel %vm1399, %v1488, 0
      %v1496 = vsel %vm1399, %v1489, 0
      %v1499 = vsel %vm1399, %v1490, 0
      %v1502 = vsel %vm1399, %v1491, 0
      %1504 = vmatprep.subr.bf16.mxu0 0
      %1505 = vmatpush1.bf16.msra.mxu0 %v417
      %1506 = vmatprep.subr.bf16.mxu0 0
      %1507 = vmatpush1.bf16.msra.mxu0 %v418
      %1508 = vmatprep.subr.bf16.mxu0 0
      %1509 = vmatpush1.bf16.msra.mxu0 %v419
      %1510 = vmatprep.subr.bf16.mxu0 0
      %1511 = vmatpush1.bf16.msra.mxu0 %v420
      %1512 = vmatprep.subr.bf16.mxu0 0
      %1513 = vmatpush1.bf16.msra.mxu0 0
      %1514 = vmatprep.subr.bf16.mxu0 0
      %1515 = vmatpush1.bf16.msra.mxu0 0
      %1516 = vmatprep.subr.bf16.mxu0 0
      %1517 = vmatpush1.bf16.msra.mxu0 0
      %1518 = vmatprep.subr.bf16.mxu0 0
      %1519 = vmatpush1.bf16.msra.mxu0 0
      %1520 = vmatprep.subr.bf16.mxu0 0
      %1521 = vmatpush1.bf16.msra.mxu0 0
      %1522 = vmatprep.subr.bf16.mxu0 0
      %1523 = vmatpush1.bf16.msra.mxu0 0
      %1524 = vmatprep.subr.bf16.mxu0 0
      %1525 = vmatpush1.bf16.msra.mxu0 0
      %1526 = vmatprep.subr.bf16.mxu0 0
      %1527 = vmatpush1.bf16.msra.mxu0 0
      %1528 = vmatprep.subr.bf16.mxu0 0
      %1529 = vmatpush1.bf16.msra.mxu0 0
      %1530 = vmatprep.subr.bf16.mxu0 0
      %1531 = vmatpush1.bf16.msra.mxu0 0
      %1532 = vmatprep.subr.bf16.mxu0 0
      %1533 = vmatpush1.bf16.msra.mxu0 0
      %1534 = vmatprep.subr.bf16.mxu0 0
      %1535 = vmatpush1.bf16.msra.mxu0 0
      %1536 = vmatprep.mubr.bf16.mxu0 0
      %1537 = vmatmul.mubr.bf16.gmra.mrb[0].mxu0 %v1493
      %v1538 = vpop.f32.mrb[0].mxu0
      %v1539 = vadd.f32 0.0, %v1538
      %v1540 = vpop.f32.mrb[0].mxu0
      %v1541 = vpop.f32.mrb[0].mxu0
      %v1542 = vadd.f32 0.0, %v1541
      %v1543 = vpop.f32.mrb[0].mxu0
      %1544 = vmatprep.mubr.bf16.mxu0 0
      %1545 = vmatmul.mubr.bf16.gmra.mrb[0].mxu0 %v1496
      %v1546 = vpop.f32.mrb[0].mxu0
      %v1547 = vadd.f32 0.0, %v1546
      %v1548 = vpop.f32.mrb[0].mxu0
      %v1549 = vpop.f32.mrb[0].mxu0
      %v1550 = vadd.f32 0.0, %v1549
      %v1551 = vpop.f32.mrb[0].mxu0
      %1552 = vmatprep.mubr.bf16.mxu0 0
      %1553 = vmatmul.mubr.bf16.gmra.mrb[0].mxu0 %v1499
      %v1554 = vpop.f32.mrb[0].mxu0
      %v1555 = vadd.f32 0.0, %v1554
      %v1556 = vpop.f32.mrb[0].mxu0
      %v1557 = vpop.f32.mrb[0].mxu0
      %v1558 = vadd.f32 0.0, %v1557
      %v1559 = vpop.f32.mrb[0].mxu0
      %1560 = vmatprep.mubr.bf16.mxu0 0
      %1561 = vmatmul.mubr.bf16.gmra.mrb[0].mxu0 %v1502
      %v1562 = vpop.f32.mrb[0].mxu0
      %v1563 = vadd.f32 0.0, %v1562
      %v1564 = vpop.f32.mrb[0].mxu0
      %v1565 = vpop.f32.mrb[0].mxu0
      %v1566 = vadd.f32 0.0, %v1565
      %v1567 = vpop.f32.mrb[0].mxu0
      %1568 = vdwg.mxu0
      %v1569 = vsel %vm803, %v1539, 0.0
      %v1570 = vsel %vm803, %v1542, 0.0
      %v1571 = vadd.f32 %v1569, %v1570
      %v1572 = vsel %vm803, %v1547, 0.0
      %v1573 = vadd.f32 %v1571, %v1572
      %v1574 = vsel %vm803, %v1550, 0.0
      %v1575 = vadd.f32 %v1573, %v1574
      %v1576 = vsel %vm803, %v1555, 0.0
      %v1577 = vadd.f32 %v1575, %v1576
      %v1578 = vsel %vm803, %v1558, 0.0
      %v1579 = vadd.f32 %v1577, %v1578
      %v1580 = vsel %vm803, %v1563, 0.0
      %v1581 = vadd.f32 %v1579, %v1580
      %v1582 = vsel %vm803, %v1566, 0.0
      %v1583 = vadd.f32 %v1581, %v1582
      %1584 = vadd.xlane.f32.xlu0 %v1583
      %v1585 = vpop.xlane.xlu0 %1584
      %v1586 = vrot.slane %v1585, 4
      %v1587 = vadd.f32 %v1585, %v1586
      %v1588 = vrot.slane %v1587, 2
      %v1589 = vadd.f32 %v1587, %v1588
      %v1590 = vrot.slane %v1589, 1
      %v1591 = vadd.f32 %v1589, %v1590
      %s1592 = vtos %v1591
      %v1593 = vrcp.pop 2048.0
      %s1594 = vtos %v1593
      %s1595 = smul.f32 %s1592, %s1594
      %v1596 = vstv %s1595
      %v1597 = vsub.f32 %v1539, %v1596
      %v1598 = vsub.f32 %v1542, %v1596
      %v1599 = vsub.f32 %v1547, %v1596
      %v1600 = vsub.f32 %v1550, %v1596
      %v1601 = vsub.f32 %v1555, %v1596
      %v1602 = vsub.f32 %v1558, %v1596
      %v1603 = vsub.f32 %v1563, %v1596
      %v1604 = vsub.f32 %v1566, %v1596
      %v1605 = vmul.f32 %v1597, %v1597
      %v1606 = vmul.f32 %v1598, %v1598
      %v1607 = vmul.f32 %v1599, %v1599
      %v1608 = vmul.f32 %v1600, %v1600
      %v1609 = vmul.f32 %v1601, %v1601
      %v1610 = vmul.f32 %v1602, %v1602
      %v1611 = vmul.f32 %v1603, %v1603
      %v1612 = vmul.f32 %v1604, %v1604
      %v1613 = vsel %vm803, %v1605, 0.0
      %v1614 = vsel %vm803, %v1606, 0.0
      %v1615 = vadd.f32 %v1613, %v1614
      %v1616 = vsel %vm803, %v1607, 0.0
      %v1617 = vadd.f32 %v1615, %v1616
      %v1618 = vsel %vm803, %v1608, 0.0
      %v1619 = vadd.f32 %v1617, %v1618
      %v1620 = vsel %vm803, %v1609, 0.0
      %v1621 = vadd.f32 %v1619, %v1620
      %v1622 = vsel %vm803, %v1610, 0.0
      %v1623 = vadd.f32 %v1621, %v1622
      %v1624 = vsel %vm803, %v1611, 0.0
      %v1625 = vadd.f32 %v1623, %v1624
      %v1626 = vsel %vm803, %v1612, 0.0
      %v1627 = vadd.f32 %v1625, %v1626
      %1628 = vadd.xlane.f32.xlu0 %v1627
      %v1629 = vpop.xlane.xlu0 %1628
      %v1630 = vrot.slane %v1629, 4
      %v1631 = vadd.f32 %v1629, %v1630
      %v1632 = vrot.slane %v1631, 2
      %v1633 = vadd.f32 %v1631, %v1632
      %v1634 = vrot.slane %v1633, 1
      %v1635 = vadd.f32 %v1633, %v1634
      %s1636 = vtos %v1635
      %v1637 = vrcp.pop 2048.0
      %s1638 = vtos %v1637
      %s1639 = smul.f32 %s1636, %s1638
      %s1640 = sadd.f32 %s1639, 1e-05
      %v1641 = vstv %s1640
      %v1642 = vrsqrt.pop %v1641
      %s1643 = vtos %v1642
      %v1644 = vstv %s1643
      %v1645 = vmul.f32 %v1597, %v1644
      %v1646 = vmul.f32 %v1598, %v1644
      %v1647 = vmul.f32 %v1599, %v1644
      %v1648 = vmul.f32 %v1600, %v1644
      %v1649 = vmul.f32 %v1601, %v1644
      %v1650 = vmul.f32 %v1602, %v1644
      %v1651 = vmul.f32 %v1603, %v1644
      %v1652 = vmul.f32 %v1604, %v1644
      %v1653 = vld [vmem:[%s8] sm:$0xff]
      %v1654 = vld [vmem:[%s8 + $0x8] sm:$0xff]
      %v1655 = vld [vmem:[%s8 + $0x10] sm:$0xff]
      %v1656 = vld [vmem:[%s8 + $0x18] sm:$0xff]
      %v1657 = vld [vmem:[%s8 + $0x20] sm:$0xff]
      %v1658 = vld [vmem:[%s8 + $0x28] sm:$0xff]
      %v1659 = vld [vmem:[%s8 + $0x30] sm:$0xff]
      %v1660 = vld [vmem:[%s8 + $0x38] sm:$0xff]
      %v1661 = vmul.f32 %v1645, %v1653
      %v1662 = vmul.f32 %v1646, %v1654
      %v1663 = vmul.f32 %v1647, %v1655
      %v1664 = vmul.f32 %v1648, %v1656
      %v1665 = vmul.f32 %v1649, %v1657
      %v1666 = vmul.f32 %v1650, %v1658
      %v1667 = vmul.f32 %v1651, %v1659
      %v1668 = vmul.f32 %v1652, %v1660
      %v1669 = vld [vmem:[%s9] sm:$0xff]
      %v1670 = vld [vmem:[%s9 + $0x8] sm:$0xff]
      %v1671 = vld [vmem:[%s9 + $0x10] sm:$0xff]
      %v1672 = vld [vmem:[%s9 + $0x18] sm:$0xff]
      %v1673 = vld [vmem:[%s9 + $0x20] sm:$0xff]
      %v1674 = vld [vmem:[%s9 + $0x28] sm:$0xff]
      %v1675 = vld [vmem:[%s9 + $0x30] sm:$0xff]
      %v1676 = vld [vmem:[%s9 + $0x38] sm:$0xff]
      %v1677 = vadd.f32 %v1661, %v1669
      %v1678 = vadd.f32 %v1662, %v1670
      %v1679 = vadd.f32 %v1663, %v1671
      %v1680 = vadd.f32 %v1664, %v1672
      %v1681 = vadd.f32 %v1665, %v1673
      %v1682 = vadd.f32 %v1666, %v1674
      %v1683 = vadd.f32 %v1667, %v1675
      %v1684 = vadd.f32 %v1668, %v1676
      %1685 = vst.msk [vmem:[%s379] sm:$0xff] %vm803, %v1677
      %1686 = vst.msk [vmem:[%s379 + $0x8] sm:$0xff] %vm803, %v1678
      %1687 = vst.msk [vmem:[%s379 + $0x10] sm:$0xff] %vm803, %v1679
      %1688 = vst.msk [vmem:[%s379 + $0x18] sm:$0xff] %vm803, %v1680
      %1689 = vst.msk [vmem:[%s379 + $0x20] sm:$0xff] %vm803, %v1681
      %1690 = vst.msk [vmem:[%s379 + $0x28] sm:$0xff] %vm803, %v1682
      %1691 = vst.msk [vmem:[%s379 + $0x30] sm:$0xff] %vm803, %v1683
      %1692 = vst.msk [vmem:[%s379 + $0x38] sm:$0xff] %vm803, %v1684
      %p1693 = scmp.lt.s32.totalorder %s21, 1
      %s1694 = scalar_select %p1693, %s21, 1
      %s1695 = smul.addr %s1694, 8
      %s1696 = smul.addr %s1695, 8
      %s1697 = scalar_lea.vmem %s10, %s1696
      // Predicated region
      $region61: #{ftt_forward.1} parent=59 // pred_check
        %p1698 = pneg %p259
      $region62: #{ftt_forward.1} parent=59 // pred_check_branch
        %1700 = sbr.rel (%p1698) target = $region64
      $region63: #{ftt_forward.1} parent=59 // pred_region
        _
      $region64: #{ftt_forward.1} parent=59 // pred_fallthru
        _
    $region60: #{ftt_forward.1} parent=5 // pred_fallthru
      _
    %p1701 = scmp.le.s32.totalorder 2, %s16
    // Predicated region
    $region65: #{ftt_forward.1} parent=5 // pred_check
      %p1702 = pneg %p1701
    $region66: #{ftt_forward.1} parent=5 // pred_check_branch
      %1704 = sbr.rel (%p1702) target = $region68
    $region67: #{ftt_forward.1} parent=5 // pred_region
      %s1705 = ssub.s32 %s16, 2
      // Predicated region
      $region69: #{ftt_forward.1} parent=67 // pred_check
        %p1706 = pneg %p265
      $region70: #{ftt_forward.1} parent=67 // pred_check_branch
        %1708 = sbr.rel (%p1706) target = $region72
      $region71: #{ftt_forward.1} parent=67 // pred_region
        %p1709 = scmp.lt.s32.totalorder %s22, 1
        %s1710 = scalar_select %p1709, %s22, 1
        %s1711 = smul.addr %s1710, 8
        %s1712 = smul.addr %s1711, 8
        %s1713 = scalar_lea.vmem %s10, %s1712
      $region72: #{ftt_forward.1} parent=67 // pred_fallthru
        _
    $region68: #{ftt_forward.1} parent=5 // pred_fallthru
      _
  $region6: #{ftt_forward.1} parent=0 // loop_footer
    %s20 = sadd.s32 1, %s16
  $region7: #{ftt_forward.1} parent=0 // loop_footer_branch
    %15 = sbr.rel target = $region3
  $region8: #{ftt_forward.1} parent=0 // loop_exit
    _

</llo_original>
